<compile_context>
chip_gen: v7x
topology: tpu7x:2x2x1
jax: 0.10.0
libtpu: 0.0.40
codegen_flags: <defaults>
</compile_context>

<pallas_src>
import jax
import jax.numpy as jnp
from jax.experimental import pallas as pl
from jax.experimental.pallas import tpu as pltpu


def coord_att_kernel(x_ref, w1_ref, b1_ref, wh_ref, bh_ref, ww_ref, bw_ref,
                     pool_ref, scale_ref, eh_ref, ew_ref, o_ref,
                     ah_sc, aw_sc):
    c = w1_ref.shape[1]
    oup = wh_ref.shape[0]
    h = eh_ref.shape[0]
    b_tile = x_ref.shape[0] // c            # examples in this grid step

    # ---- pooled stats for the whole (B*C, S) slab: one lane-dense matmul ----
    # pool_ref is a 0/1 (S, H+W) matrix in the activation dtype; accumulate in
    # f32 and apply the 1/W (first H cols) / 1/H (last W cols) mean scaling on
    # the tiny pooled result so means are exact even with bf16 operands.
    pooled = jnp.dot(x_ref[...], pool_ref[...],
                     preferred_element_type=jnp.float32)        # (B*C, H+W) f32
    pooled = pooled * scale_ref[...]

    w1 = w1_ref[...].astype(jnp.float32)
    b1 = b1_ref[...].astype(jnp.float32)
    wh = wh_ref[...].astype(jnp.float32)
    bh = bh_ref[...].astype(jnp.float32)
    ww = ww_ref[...].astype(jnp.float32)
    bw = bw_ref[...].astype(jnp.float32)

    # ---- tiny per-example path: conv1 -> InstanceNorm -> h_swish -> gates ----
    # Only (MIP, H+W)-sized tensors live here; results are stored straight to
    # small VMEM scratch so nothing big stays live across iterations.
    for b in range(b_tile):
        yb = jnp.dot(w1, pooled[b * c:(b + 1) * c, :],
                     preferred_element_type=jnp.float32) + b1   # (MIP, H+W)
        # InstanceNorm2d(mip): affine=False, biased variance, eps=1e-5,
        # normalized per channel over the (H+W, 1) spatial extent.
        mu = jnp.mean(yb, axis=1, keepdims=True)
        var = jnp.mean((yb - mu) * (yb - mu), axis=1, keepdims=True)
        yb = (yb - mu) * jax.lax.rsqrt(var + 1e-5)
        # h_swish: v * relu6(v + 3) / 6
        yb = yb * (jnp.clip(yb + 3.0, 0.0, 6.0) * (1.0 / 6.0))
        a_h = jax.nn.sigmoid(
            jnp.dot(wh, yb[:, :h], preferred_element_type=jnp.float32) + bh)
        a_w = jax.nn.sigmoid(
            jnp.dot(ww, yb[:, h:], preferred_element_type=jnp.float32) + bw)
        ah_sc[b * oup:(b + 1) * oup, :] = a_h.astype(ah_sc.dtype)
        aw_sc[b * oup:(b + 1) * oup, :] = a_w.astype(aw_sc.dtype)

    # ---- lane-dense gate expansion + gating on the merged slab ----
    #   (a_h @ E_h)[o, hW+w] = a_h[o, h]     (a_w @ E_w)[o, hW+w] = a_w[o, w]
    # computed in the activation dtype (no f32 (C, S) temporaries).
    gate = (jnp.dot(ah_sc[...], eh_ref[...]) *
            jnp.dot(aw_sc[...], ew_ref[...]) + 1.0)             # (B*C, S)
    # out = identity * a_w * a_h + identity  ==  identity * gate
    o_ref[...] = (x_ref[...] * gate).astype(o_ref.dtype)


def coord_att(x, w1, b1, wh, bh, ww, bw):
    n, c, h, w = x.shape
    mip = w1.shape[0]
    oup = wh.shape[0]
    assert oup == c, "CoordAtt gating requires oup == inp"
    s = h * w
    s_pad = ((s + 127) // 128) * 128          # keep stores unmasked lane-dense

    # Merged lane-dense slab (N*C, S_pad); reshape is free, pad is rare.
    x2 = x.reshape(n * c, s)
    if s_pad != s:
        x2 = jnp.pad(x2, ((0, 0), (0, s_pad - s)))

    # Constant 0/1 pooling / expansion matrices in the activation dtype
    # (bf16 activations => bf16 constants: half the DMA/VMEM, bf16 MXU rate).
    cdt = x.dtype
    cols = jnp.arange(s_pad)
    row_id = jnp.where(cols < s, cols // w, -1)
    col_id = jnp.where(cols < s, cols % w, -1)
    eh = (jnp.arange(h)[:, None] == row_id[None, :]).astype(cdt)   # (H, S_pad)
    ew = (jnp.arange(w)[:, None] == col_id[None, :]).astype(cdt)   # (W, S_pad)
    pool_mat = jnp.concatenate([eh, ew], axis=0).T                 # (S_pad, H+W)
    scale_row = jnp.concatenate(
        [jnp.full((h,), 1.0 / w, jnp.float32),
         jnp.full((w,), 1.0 / h, jnp.float32)])[None, :]           # (1, H+W) f32

    # Biases pre-shaped (rows, 1): no per-step transposes in the kernel.
    b1_ = b1.reshape(mip, 1).astype(jnp.float32)
    bh_ = bh.reshape(oup, 1).astype(jnp.float32)
    bw_ = bw.reshape(oup, 1).astype(jnp.float32)

    # ---- generation-aware VMEM budget and batch-tile selection ----
    itemsize = jnp.dtype(x.dtype).itemsize
    try:
        vmem_cap = int(pltpu.get_tpu_info().vmem_capacity_bytes)  # 64 MiB v7x / 128 MiB v5e,v6e
    except Exception:
        vmem_cap = 64 * 1024 * 1024                               # conservative (v7x)
    vmem_limit = int(min(100 * 1024 * 1024, (vmem_cap * 3) // 4))

    slab = c * s_pad * itemsize               # one example's (C, S) slab
    # per-example footprint: in + out blocks double-buffered (4 slabs) + gate /
    # expansion temporaries (~3 slabs, activation dtype) + tiny f32 pooled stats.
    per_ex = 7 * slab + 3 * c * (h + w) * 4
    const_bytes = 2 * (h + w) * s_pad * itemsize + (h + w) * 4
    budget = max(vmem_limit - 2 * const_bytes - (2 << 20), per_ex)
    max_bt = max(1, min(int(budget // per_ex), 16))   # 16 caps the tiny-path unroll
    # TODO(synk): if even a single (C, S) slab exceeds the budget (e.g. C=512 at
    # 112x112 on v7x), add H-chunk streaming of x for the pooling accumulation
    # and the gating multiply, keeping the tiny pooled stats in VMEM scratch.

    def pick_b_tile():
        aligned_best, any_best = None, None
        for bt in range(min(n, max_bt), 0, -1):
            if n % bt:
                continue
            if any_best is None:
                any_best = bt
            if (bt * c) % 8 == 0 or bt == n:          # sublane-aligned row blocks
                if aligned_best is None:
                    aligned_best = bt
                steps = n // bt
                if steps >= 2 and steps % 2 == 0:     # even step count: both v7x TCs busy
                    return bt
        return aligned_best if aligned_best is not None else (any_best or n)

    b_tile = pick_b_tile()
    grid = (n // b_tile,)

    def build(single_buffer_consts):
        def cspec(shape):
            nd = len(shape)
            idx_map = lambda i: (0,) * nd
            if single_buffer_consts:
                # Constant index_map => nothing to prefetch; single-buffer to
                # halve the constants' VMEM footprint.
                return pl.BlockSpec(shape, idx_map, pipeline_mode=pl.Buffered(1))
            return pl.BlockSpec(shape, idx_map)

        return pl.pallas_call(
            coord_att_kernel,
            out_shape=jax.ShapeDtypeStruct((n * c, s_pad), x.dtype),
            grid=grid,
            in_specs=[
                pl.BlockSpec((b_tile * c, s_pad), lambda i: (i, 0)),
                cspec((mip, c)),
                cspec((mip, 1)),
                cspec((oup, mip)),
                cspec((oup, 1)),
                cspec((oup, mip)),
                cspec((oup, 1)),
                cspec((s_pad, h + w)),
                cspec((1, h + w)),
                cspec((h, s_pad)),
                cspec((w, s_pad)),
            ],
            out_specs=pl.BlockSpec((b_tile * c, s_pad), lambda i: (i, 0)),
            scratch_shapes=[pltpu.VMEM((b_tile * oup, h), x.dtype),
                            pltpu.VMEM((b_tile * oup, w), x.dtype)],
            compiler_params=pltpu.CompilerParams(
                dimension_semantics=("parallel",),
                vmem_limit_bytes=vmem_limit,
            ),
        )

    args = (x2, w1, b1_, wh, bh_, ww, bw_, pool_mat, scale_row, eh, ew)
    try:
        out2 = build(True)(*args)
    except Exception:
        # pipeline_mode=pl.Buffered(1) unavailable on this jax version: fall
        # back to the default double-buffered constants (correct, more VMEM).
        out2 = build(False)(*args)

    if s_pad != s:
        out2 = out2[:, :s]
    return out2.reshape(n, c, h, w)


def coord_att_ref(x, w1, b1, wh, bh, ww, bw):
    # Pure-JAX reference mirroring the PyTorch forward (NCHW).
    x32 = x.astype(jnp.float32)
    n, c, h, w = x.shape
    x_h = jnp.mean(x32, axis=3)                                    # (n, c, h)
    x_w = jnp.mean(x32, axis=2)                                    # (n, c, w)
    y = jnp.concatenate([x_h, x_w], axis=2)                        # (n, c, h+w)
    y = jnp.einsum('mc,ncs->nms', w1, y) + b1[None, :, None]       # (n, mip, h+w)
    mu = jnp.mean(y, axis=2, keepdims=True)
    var = jnp.mean((y - mu) ** 2, axis=2, keepdims=True)
    y = (y - mu) / jnp.sqrt(var + 1e-5)
    y = y * (jnp.clip(y + 3.0, 0.0, 6.0) / 6.0)
    y_h, y_w = y[:, :, :h], y[:, :, h:]
    a_h = jax.nn.sigmoid(jnp.einsum('om,nms->nos', wh, y_h) + bh[None, :, None])
    a_w = jax.nn.sigmoid(jnp.einsum('om,nms->nos', ww, y_w) + bw[None, :, None])
    out = x32 * a_h[:, :, :, None] * a_w[:, :, None, :] + x32
    return out.astype(x.dtype)


if __name__ == "__main__":
    inp = oup = 4
    reduction = 32
    mip = max(16, inp // reduction)             # = 16
    n, h, w = 2, 16, 16

    key = jax.random.PRNGKey(0)
    kx, k1, k2, k3, k4, k5, k6 = jax.random.split(key, 7)

    x = jax.random.normal(kx, (n, inp, h, w), dtype=jnp.float32)

    # Deterministic synthetic parameters (1x1 conv weights squeezed to 2D).
    w1 = 0.3 * jax.random.normal(k1, (mip, inp), dtype=jnp.float32)
    b1 = 0.1 * jax.random.normal(k2, (mip,), dtype=jnp.float32)
    wh = 0.3 * jax.random.normal(k3, (oup, mip), dtype=jnp.float32)
    bh = 0.1 * jax.random.normal(k4, (oup,), dtype=jnp.float32)
    ww = 0.3 * jax.random.normal(k5, (oup, mip), dtype=jnp.float32)
    bw = 0.1 * jax.random.normal(k6, (oup,), dtype=jnp.float32)

    out = coord_att(x, w1, b1, wh, bh, ww, bw)
    out = jax.block_until_ready(out)

    ref = coord_att_ref(x, w1, b1, wh, bh, ww, bw)
    assert out.shape == (n, inp, h, w)
    assert jnp.allclose(out, ref, atol=1e-4, rtol=1e-4)

    print("KERNEL_OK")
</pallas_src>

<mosaic_0001>
module attributes {stable_mosaic.version = 11 : i64} {
  func.func @coord_att_kernel(%arg0: i32, %arg1: memref<8x256xf32, #tpu.memory_space<vmem>>, %arg2: memref<16x4xf32, #tpu.memory_space<vmem>>, %arg3: memref<16x1xf32, #tpu.memory_space<vmem>>, %arg4: memref<4x16xf32, #tpu.memory_space<vmem>>, %arg5: memref<4x1xf32, #tpu.memory_space<vmem>>, %arg6: memref<4x16xf32, #tpu.memory_space<vmem>>, %arg7: memref<4x1xf32, #tpu.memory_space<vmem>>, %arg8: memref<256x32xf32, #tpu.memory_space<vmem>>, %arg9: memref<1x32xf32, #tpu.memory_space<vmem>>, %arg10: memref<16x256xf32, #tpu.memory_space<vmem>>, %arg11: memref<16x256xf32, #tpu.memory_space<vmem>>, %arg12: memref<8x256xf32, #tpu.memory_space<vmem>>, %arg13: memref<8x16xf32, #tpu.memory_space<vmem>>, %arg14: memref<8x16xf32, #tpu.memory_space<vmem>>) attributes {dimension_semantics = [#tpu.dimension_semantics<parallel>], iteration_bounds = array<i64: 1>, scalar_prefetch = 0 : i64, scratch_operands = 2 : i64, tpu.core_type = #tpu.core_type<tc>, window_params = [{transform_indices = @transform_0, window_bounds = array<i64: 8, 256>}, {pipeline_mode = #tpu.pipeline_mode<synchronous>, transform_indices = @transform_1, window_bounds = array<i64: 16, 4>}, {pipeline_mode = #tpu.pipeline_mode<synchronous>, transform_indices = @transform_2, window_bounds = array<i64: 16, 1>}, {pipeline_mode = #tpu.pipeline_mode<synchronous>, transform_indices = @transform_3, window_bounds = array<i64: 4, 16>}, {pipeline_mode = #tpu.pipeline_mode<synchronous>, transform_indices = @transform_4, window_bounds = array<i64: 4, 1>}, {pipeline_mode = #tpu.pipeline_mode<synchronous>, transform_indices = @transform_5, window_bounds = array<i64: 4, 16>}, {pipeline_mode = #tpu.pipeline_mode<synchronous>, transform_indices = @transform_6, window_bounds = array<i64: 4, 1>}, {pipeline_mode = #tpu.pipeline_mode<synchronous>, transform_indices = @transform_7, window_bounds = array<i64: 256, 32>}, {pipeline_mode = #tpu.pipeline_mode<synchronous>, transform_indices = @transform_8, window_bounds = array<i64: 1, 32>}, {pipeline_mode = #tpu.pipeline_mode<synchronous>, transform_indices = @transform_9, window_bounds = array<i64: 16, 256>}, {pipeline_mode = #tpu.pipeline_mode<synchronous>, transform_indices = @transform_10, window_bounds = array<i64: 16, 256>}, {transform_indices = @transform_11, window_bounds = array<i64: 8, 256>}]} {
    %c0 = arith.constant 0 : index
    %c0_0 = arith.constant 0 : index
    %0 = vector.load %arg1[%c0, %c0_0] : memref<8x256xf32, #tpu.memory_space<vmem>>, vector<8x256xf32>
    %c0_1 = arith.constant 0 : index
    %c0_2 = arith.constant 0 : index
    %1 = vector.load %arg8[%c0_1, %c0_2] : memref<256x32xf32, #tpu.memory_space<vmem>>, vector<256x32xf32>
    %cst = arith.constant dense<0.000000e+00> : vector<8x32xf32>
    %2 = tpu.matmul %0, %1, %cst {dimension_numbers = #tpu.dot_dimension_numbers<[1], [0], [0], [1], [0, 0, 1, 1], [], []>} : vector<8x256xf32>, vector<256x32xf32>, vector<8x32xf32> -> vector<8x32xf32>
    %c0_3 = arith.constant 0 : index
    %c0_4 = arith.constant 0 : index
    %3 = vector.load %arg9[%c0_3, %c0_4] : memref<1x32xf32, #tpu.memory_space<vmem>>, vector<1x32xf32>
    %4 = vector.broadcast %3 : vector<1x32xf32> to vector<8x32xf32>
    %5 = arith.mulf %2, %4 : vector<8x32xf32>
    %c0_5 = arith.constant 0 : index
    %c0_6 = arith.constant 0 : index
    %6 = vector.load %arg2[%c0_5, %c0_6] : memref<16x4xf32, #tpu.memory_space<vmem>>, vector<16x4xf32>
    %c0_7 = arith.constant 0 : index
    %c0_8 = arith.constant 0 : index
    %7 = vector.load %arg3[%c0_7, %c0_8] : memref<16x1xf32, #tpu.memory_space<vmem>>, vector<16x1xf32>
    %c0_9 = arith.constant 0 : index
    %c0_10 = arith.constant 0 : index
    %8 = vector.load %arg4[%c0_9, %c0_10] : memref<4x16xf32, #tpu.memory_space<vmem>>, vector<4x16xf32>
    %c0_11 = arith.constant 0 : index
    %c0_12 = arith.constant 0 : index
    %9 = vector.load %arg5[%c0_11, %c0_12] : memref<4x1xf32, #tpu.memory_space<vmem>>, vector<4x1xf32>
    %c0_13 = arith.constant 0 : index
    %c0_14 = arith.constant 0 : index
    %10 = vector.load %arg6[%c0_13, %c0_14] : memref<4x16xf32, #tpu.memory_space<vmem>>, vector<4x16xf32>
    %c0_15 = arith.constant 0 : index
    %c0_16 = arith.constant 0 : index
    %11 = vector.load %arg7[%c0_15, %c0_16] : memref<4x1xf32, #tpu.memory_space<vmem>>, vector<4x1xf32>
    %12 = vector.extract_strided_slice %5 {offsets = [0, 0], sizes = [4, 32], strides = [1, 1]} : vector<8x32xf32> to vector<4x32xf32>
    %cst_17 = arith.constant dense<0.000000e+00> : vector<16x32xf32>
    %13 = tpu.matmul %6, %12, %cst_17 {dimension_numbers = #tpu.dot_dimension_numbers<[1], [0], [0], [1], [0, 0, 1, 1], [], []>} : vector<16x4xf32>, vector<4x32xf32>, vector<16x32xf32> -> vector<16x32xf32>
    %14 = vector.broadcast %7 : vector<16x1xf32> to vector<16x32xf32>
    %15 = arith.addf %13, %14 : vector<16x32xf32>
    %cst_18 = arith.constant dense<0.000000e+00> : vector<16xf32>
    %16 = vector.multi_reduction <add>, %15, %cst_18 [1] : vector<16x32xf32> to vector<16xf32>
    %17 = vector.shape_cast %16 : vector<16xf32> to vector<16x1xf32>
    %cst_19 = arith.constant 3.200000e+01 : f32
    %18 = vector.broadcast %cst_19 : f32 to vector<16x1xf32>
    %19 = arith.divf %17, %18 : vector<16x1xf32>
    %20 = vector.broadcast %19 : vector<16x1xf32> to vector<16x32xf32>
    %21 = arith.subf %15, %20 : vector<16x32xf32>
    %22 = vector.broadcast %19 : vector<16x1xf32> to vector<16x32xf32>
    %23 = arith.subf %15, %22 : vector<16x32xf32>
    %24 = arith.mulf %21, %23 : vector<16x32xf32>
    %cst_20 = arith.constant dense<0.000000e+00> : vector<16xf32>
    %25 = vector.multi_reduction <add>, %24, %cst_20 [1] : vector<16x32xf32> to vector<16xf32>
    %26 = vector.shape_cast %25 : vector<16xf32> to vector<16x1xf32>
    %cst_21 = arith.constant 3.200000e+01 : f32
    %27 = vector.broadcast %cst_21 : f32 to vector<16x1xf32>
    %28 = arith.divf %26, %27 : vector<16x1xf32>
    %29 = vector.broadcast %19 : vector<16x1xf32> to vector<16x32xf32>
    %30 = arith.subf %15, %29 : vector<16x32xf32>
    %cst_22 = arith.constant 9.99999974E-6 : f32
    %31 = vector.broadcast %cst_22 : f32 to vector<16x1xf32>
    %32 = arith.addf %28, %31 : vector<16x1xf32>
    %33 = math.rsqrt %32 : vector<16x1xf32>
    %34 = vector.broadcast %33 : vector<16x1xf32> to vector<16x32xf32>
    %35 = arith.mulf %30, %34 : vector<16x32xf32>
    %cst_23 = arith.constant 3.000000e+00 : f32
    %36 = vector.broadcast %cst_23 : f32 to vector<16x32xf32>
    %37 = arith.addf %35, %36 : vector<16x32xf32>
    %cst_24 = arith.constant 0.000000e+00 : f32
    %cst_25 = arith.constant 6.000000e+00 : f32
    %38 = vector.broadcast %cst_24 : f32 to vector<16x32xf32>
    %39 = arith.maximumf %38, %37 : vector<16x32xf32>
    %40 = vector.broadcast %cst_25 : f32 to vector<16x32xf32>
    %41 = arith.minimumf %40, %39 : vector<16x32xf32>
    %cst_26 = arith.constant 0.166666672 : f32
    %42 = vector.broadcast %cst_26 : f32 to vector<16x32xf32>
    %43 = arith.mulf %41, %42 : vector<16x32xf32>
    %44 = arith.mulf %35, %43 : vector<16x32xf32>
    %45 = vector.extract_strided_slice %44 {offsets = [0, 0], sizes = [16, 16], strides = [1, 1]} : vector<16x32xf32> to vector<16x16xf32>
    %cst_27 = arith.constant dense<0.000000e+00> : vector<4x16xf32>
    %46 = tpu.matmul %8, %45, %cst_27 {dimension_numbers = #tpu.dot_dimension_numbers<[1], [0], [0], [1], [0, 0, 1, 1], [], []>} : vector<4x16xf32>, vector<16x16xf32>, vector<4x16xf32> -> vector<4x16xf32>
    %47 = vector.broadcast %9 : vector<4x1xf32> to vector<4x16xf32>
    %48 = arith.addf %46, %47 : vector<4x16xf32>
    %49 = arith.negf %48 : vector<4x16xf32>
    %50 = math.exp %49 : vector<4x16xf32>
    %cst_28 = arith.constant 1.000000e+00 : f32
    %51 = vector.broadcast %cst_28 : f32 to vector<4x16xf32>
    %52 = arith.addf %51, %50 : vector<4x16xf32>
    %53 = arith.divf %51, %52 : vector<4x16xf32>
    %54 = vector.extract_strided_slice %44 {offsets = [0, 16], sizes = [16, 16], strides = [1, 1]} : vector<16x32xf32> to vector<16x16xf32>
    %cst_29 = arith.constant dense<0.000000e+00> : vector<4x16xf32>
    %55 = tpu.matmul %10, %54, %cst_29 {dimension_numbers = #tpu.dot_dimension_numbers<[1], [0], [0], [1], [0, 0, 1, 1], [], []>} : vector<4x16xf32>, vector<16x16xf32>, vector<4x16xf32> -> vector<4x16xf32>
    %56 = vector.broadcast %11 : vector<4x1xf32> to vector<4x16xf32>
    %57 = arith.addf %55, %56 : vector<4x16xf32>
    %58 = arith.negf %57 : vector<4x16xf32>
    %59 = math.exp %58 : vector<4x16xf32>
    %cst_30 = arith.constant 1.000000e+00 : f32
    %60 = vector.broadcast %cst_30 : f32 to vector<4x16xf32>
    %61 = arith.addf %60, %59 : vector<4x16xf32>
    %62 = arith.divf %60, %61 : vector<4x16xf32>
    %c0_31 = arith.constant 0 : index
    %c0_32 = arith.constant 0 : index
    %63 = vector.load %arg13[%c0_31, %c0_32] : memref<8x16xf32, #tpu.memory_space<vmem>>, vector<4x16xf32>
    tpu.vector_store %arg13[%c0_31, %c0_32], %53 {strides = array<i32>} : memref<8x16xf32, #tpu.memory_space<vmem>>, vector<4x16xf32>,
    %c0_33 = arith.constant 0 : index
    %c0_34 = arith.constant 0 : index
    %64 = vector.load %arg14[%c0_33, %c0_34] : memref<8x16xf32, #tpu.memory_space<vmem>>, vector<4x16xf32>
    tpu.vector_store %arg14[%c0_33, %c0_34], %62 {strides = array<i32>} : memref<8x16xf32, #tpu.memory_space<vmem>>, vector<4x16xf32>,
    %65 = vector.extract_strided_slice %5 {offsets = [4, 0], sizes = [4, 32], strides = [1, 1]} : vector<8x32xf32> to vector<4x32xf32>
    %cst_35 = arith.constant dense<0.000000e+00> : vector<16x32xf32>
    %66 = tpu.matmul %6, %65, %cst_35 {dimension_numbers = #tpu.dot_dimension_numbers<[1], [0], [0], [1], [0, 0, 1, 1], [], []>} : vector<16x4xf32>, vector<4x32xf32>, vector<16x32xf32> -> vector<16x32xf32>
    %67 = vector.broadcast %7 : vector<16x1xf32> to vector<16x32xf32>
    %68 = arith.addf %66, %67 : vector<16x32xf32>
    %cst_36 = arith.constant dense<0.000000e+00> : vector<16xf32>
    %69 = vector.multi_reduction <add>, %68, %cst_36 [1] : vector<16x32xf32> to vector<16xf32>
    %70 = vector.shape_cast %69 : vector<16xf32> to vector<16x1xf32>
    %cst_37 = arith.constant 3.200000e+01 : f32
    %71 = vector.broadcast %cst_37 : f32 to vector<16x1xf32>
    %72 = arith.divf %70, %71 : vector<16x1xf32>
    %73 = vector.broadcast %72 : vector<16x1xf32> to vector<16x32xf32>
    %74 = arith.subf %68, %73 : vector<16x32xf32>
    %75 = vector.broadcast %72 : vector<16x1xf32> to vector<16x32xf32>
    %76 = arith.subf %68, %75 : vector<16x32xf32>
    %77 = arith.mulf %74, %76 : vector<16x32xf32>
    %cst_38 = arith.constant dense<0.000000e+00> : vector<16xf32>
    %78 = vector.multi_reduction <add>, %77, %cst_38 [1] : vector<16x32xf32> to vector<16xf32>
    %79 = vector.shape_cast %78 : vector<16xf32> to vector<16x1xf32>
    %cst_39 = arith.constant 3.200000e+01 : f32
    %80 = vector.broadcast %cst_39 : f32 to vector<16x1xf32>
    %81 = arith.divf %79, %80 : vector<16x1xf32>
    %82 = vector.broadcast %72 : vector<16x1xf32> to vector<16x32xf32>
    %83 = arith.subf %68, %82 : vector<16x32xf32>
    %cst_40 = arith.constant 9.99999974E-6 : f32
    %84 = vector.broadcast %cst_40 : f32 to vector<16x1xf32>
    %85 = arith.addf %81, %84 : vector<16x1xf32>
    %86 = math.rsqrt %85 : vector<16x1xf32>
    %87 = vector.broadcast %86 : vector<16x1xf32> to vector<16x32xf32>
    %88 = arith.mulf %83, %87 : vector<16x32xf32>
    %cst_41 = arith.constant 3.000000e+00 : f32
    %89 = vector.broadcast %cst_41 : f32 to vector<16x32xf32>
    %90 = arith.addf %88, %89 : vector<16x32xf32>
    %cst_42 = arith.constant 0.000000e+00 : f32
    %cst_43 = arith.constant 6.000000e+00 : f32
    %91 = vector.broadcast %cst_42 : f32 to vector<16x32xf32>
    %92 = arith.maximumf %91, %90 : vector<16x32xf32>
    %93 = vector.broadcast %cst_43 : f32 to vector<16x32xf32>
    %94 = arith.minimumf %93, %92 : vector<16x32xf32>
    %cst_44 = arith.constant 0.166666672 : f32
    %95 = vector.broadcast %cst_44 : f32 to vector<16x32xf32>
    %96 = arith.mulf %94, %95 : vector<16x32xf32>
    %97 = arith.mulf %88, %96 : vector<16x32xf32>
    %98 = vector.extract_strided_slice %97 {offsets = [0, 0], sizes = [16, 16], strides = [1, 1]} : vector<16x32xf32> to vector<16x16xf32>
    %cst_45 = arith.constant dense<0.000000e+00> : vector<4x16xf32>
    %99 = tpu.matmul %8, %98, %cst_45 {dimension_numbers = #tpu.dot_dimension_numbers<[1], [0], [0], [1], [0, 0, 1, 1], [], []>} : vector<4x16xf32>, vector<16x16xf32>, vector<4x16xf32> -> vector<4x16xf32>
    %100 = vector.broadcast %9 : vector<4x1xf32> to vector<4x16xf32>
    %101 = arith.addf %99, %100 : vector<4x16xf32>
    %102 = arith.negf %101 : vector<4x16xf32>
    %103 = math.exp %102 : vector<4x16xf32>
    %cst_46 = arith.constant 1.000000e+00 : f32
    %104 = vector.broadcast %cst_46 : f32 to vector<4x16xf32>
    %105 = arith.addf %104, %103 : vector<4x16xf32>
    %106 = arith.divf %104, %105 : vector<4x16xf32>
    %107 = vector.extract_strided_slice %97 {offsets = [0, 16], sizes = [16, 16], strides = [1, 1]} : vector<16x32xf32> to vector<16x16xf32>
    %cst_47 = arith.constant dense<0.000000e+00> : vector<4x16xf32>
    %108 = tpu.matmul %10, %107, %cst_47 {dimension_numbers = #tpu.dot_dimension_numbers<[1], [0], [0], [1], [0, 0, 1, 1], [], []>} : vector<4x16xf32>, vector<16x16xf32>, vector<4x16xf32> -> vector<4x16xf32>
    %109 = vector.broadcast %11 : vector<4x1xf32> to vector<4x16xf32>
    %110 = arith.addf %108, %109 : vector<4x16xf32>
    %111 = arith.negf %110 : vector<4x16xf32>
    %112 = math.exp %111 : vector<4x16xf32>
    %cst_48 = arith.constant 1.000000e+00 : f32
    %113 = vector.broadcast %cst_48 : f32 to vector<4x16xf32>
    %114 = arith.addf %113, %112 : vector<4x16xf32>
    %115 = arith.divf %113, %114 : vector<4x16xf32>
    %c4 = arith.constant 4 : index
    %c0_49 = arith.constant 0 : index
    %116 = vector.load %arg13[%c4, %c0_49] : memref<8x16xf32, #tpu.memory_space<vmem>>, vector<4x16xf32>
    tpu.vector_store %arg13[%c4, %c0_49], %106 {strides = array<i32>} : memref<8x16xf32, #tpu.memory_space<vmem>>, vector<4x16xf32>,
    %c4_50 = arith.constant 4 : index
    %c0_51 = arith.constant 0 : index
    %117 = vector.load %arg14[%c4_50, %c0_51] : memref<8x16xf32, #tpu.memory_space<vmem>>, vector<4x16xf32>
    tpu.vector_store %arg14[%c4_50, %c0_51], %115 {strides = array<i32>} : memref<8x16xf32, #tpu.memory_space<vmem>>, vector<4x16xf32>,
    %c0_52 = arith.constant 0 : index
    %c0_53 = arith.constant 0 : index
    %118 = vector.load %arg13[%c0_52, %c0_53] : memref<8x16xf32, #tpu.memory_space<vmem>>, vector<8x16xf32>
    %c0_54 = arith.constant 0 : index
    %c0_55 = arith.constant 0 : index
    %119 = vector.load %arg10[%c0_54, %c0_55] : memref<16x256xf32, #tpu.memory_space<vmem>>, vector<16x256xf32>
    %cst_56 = arith.constant dense<0.000000e+00> : vector<8x256xf32>
    %120 = tpu.matmul %118, %119, %cst_56 {dimension_numbers = #tpu.dot_dimension_numbers<[1], [0], [0], [1], [0, 0, 1, 1], [], []>} : vector<8x16xf32>, vector<16x256xf32>, vector<8x256xf32> -> vector<8x256xf32>
    %c0_57 = arith.constant 0 : index
    %c0_58 = arith.constant 0 : index
    %121 = vector.load %arg14[%c0_57, %c0_58] : memref<8x16xf32, #tpu.memory_space<vmem>>, vector<8x16xf32>
    %c0_59 = arith.constant 0 : index
    %c0_60 = arith.constant 0 : index
    %122 = vector.load %arg11[%c0_59, %c0_60] : memref<16x256xf32, #tpu.memory_space<vmem>>, vector<16x256xf32>
    %cst_61 = arith.constant dense<0.000000e+00> : vector<8x256xf32>
    %123 = tpu.matmul %121, %122, %cst_61 {dimension_numbers = #tpu.dot_dimension_numbers<[1], [0], [0], [1], [0, 0, 1, 1], [], []>} : vector<8x16xf32>, vector<16x256xf32>, vector<8x256xf32> -> vector<8x256xf32>
    %124 = arith.mulf %120, %123 : vector<8x256xf32>
    %cst_62 = arith.constant 1.000000e+00 : f32
    %125 = vector.broadcast %cst_62 : f32 to vector<8x256xf32>
    %126 = arith.addf %124, %125 : vector<8x256xf32>
    %c0_63 = arith.constant 0 : index
    %c0_64 = arith.constant 0 : index
    %127 = vector.load %arg1[%c0_63, %c0_64] : memref<8x256xf32, #tpu.memory_space<vmem>>, vector<8x256xf32>
    %128 = arith.mulf %127, %126 : vector<8x256xf32>
    %c0_65 = arith.constant 0 : index
    %c0_66 = arith.constant 0 : index
    %129 = vector.load %arg12[%c0_65, %c0_66] : memref<8x256xf32, #tpu.memory_space<vmem>>, vector<8x256xf32>
    tpu.vector_store %arg12[%c0_65, %c0_66], %128 {strides = array<i32>} : memref<8x256xf32, #tpu.memory_space<vmem>>, vector<8x256xf32>,
    return
  }
  func.func @transform_0(%arg0: i32) -> (i32, i32) {
    %c0_i32 = arith.constant 0 : i32
    %c0_i32_0 = arith.constant 0 : i32
    return %arg0, %c0_i32 : i32, i32
  }
  func.func @transform_1(%arg0: i32) -> (i32, i32) {
    %c0_i32 = arith.constant 0 : i32
    %c0_i32_0 = arith.constant 0 : i32
    %c0_i32_1 = arith.constant 0 : i32
    return %c0_i32, %c0_i32_0 : i32, i32
  }
  func.func @transform_2(%arg0: i32) -> (i32, i32) {
    %c0_i32 = arith.constant 0 : i32
    %c0_i32_0 = arith.constant 0 : i32
    %c0_i32_1 = arith.constant 0 : i32
    return %c0_i32, %c0_i32_0 : i32, i32
  }
  func.func @transform_3(%arg0: i32) -> (i32, i32) {
    %c0_i32 = arith.constant 0 : i32
    %c0_i32_0 = arith.constant 0 : i32
    %c0_i32_1 = arith.constant 0 : i32
    return %c0_i32, %c0_i32_0 : i32, i32
  }
  func.func @transform_4(%arg0: i32) -> (i32, i32) {
    %c0_i32 = arith.constant 0 : i32
    %c0_i32_0 = arith.constant 0 : i32
    %c0_i32_1 = arith.constant 0 : i32
    return %c0_i32, %c0_i32_0 : i32, i32
  }
  func.func @transform_5(%arg0: i32) -> (i32, i32) {
    %c0_i32 = arith.constant 0 : i32
    %c0_i32_0 = arith.constant 0 : i32
    %c0_i32_1 = arith.constant 0 : i32
    return %c0_i32, %c0_i32_0 : i32, i32
  }
  func.func @transform_6(%arg0: i32) -> (i32, i32) {
    %c0_i32 = arith.constant 0 : i32
    %c0_i32_0 = arith.constant 0 : i32
    %c0_i32_1 = arith.constant 0 : i32
    return %c0_i32, %c0_i32_0 : i32, i32
  }
  func.func @transform_7(%arg0: i32) -> (i32, i32) {
    %c0_i32 = arith.constant 0 : i32
    %c0_i32_0 = arith.constant 0 : i32
    %c0_i32_1 = arith.constant 0 : i32
    return %c0_i32, %c0_i32_0 : i32, i32
  }
  func.func @transform_8(%arg0: i32) -> (i32, i32) {
    %c0_i32 = arith.constant 0 : i32
    %c0_i32_0 = arith.constant 0 : i32
    %c0_i32_1 = arith.constant 0 : i32
    return %c0_i32, %c0_i32_0 : i32, i32
  }
  func.func @transform_9(%arg0: i32) -> (i32, i32) {
    %c0_i32 = arith.constant 0 : i32
    %c0_i32_0 = arith.constant 0 : i32
    %c0_i32_1 = arith.constant 0 : i32
    return %c0_i32, %c0_i32_0 : i32, i32
  }
  func.func @transform_10(%arg0: i32) -> (i32, i32) {
    %c0_i32 = arith.constant 0 : i32
    %c0_i32_0 = arith.constant 0 : i32
    %c0_i32_1 = arith.constant 0 : i32
    return %c0_i32, %c0_i32_0 : i32, i32
  }
  func.func @transform_11(%arg0: i32) -> (i32, i32) {
    %c0_i32 = arith.constant 0 : i32
    %c0_i32_0 = arith.constant 0 : i32
    return %arg0, %c0_i32 : i32, i32
  }
}

module attributes {stable_mosaic.version = 11 : i64} {
  func.func @coord_att_kernel(%arg0: i32, %arg1: memref<8x256xf32, #tpu.memory_space<vmem>>, %arg2: memref<16x4xf32, #tpu.memory_space<vmem>>, %arg3: memref<16x1xf32, #tpu.memory_space<vmem>>, %arg4: memref<4x16xf32, #tpu.memory_space<vmem>>, %arg5: memref<4x1xf32, #tpu.memory_space<vmem>>, %arg6: memref<4x16xf32, #tpu.memory_space<vmem>>, %arg7: memref<4x1xf32, #tpu.memory_space<vmem>>, %arg8: memref<256x32xf32, #tpu.memory_space<vmem>>, %arg9: memref<1x32xf32, #tpu.memory_space<vmem>>, %arg10: memref<16x256xf32, #tpu.memory_space<vmem>>, %arg11: memref<16x256xf32, #tpu.memory_space<vmem>>, %arg12: memref<8x256xf32, #tpu.memory_space<vmem>>, %arg13: memref<8x16xf32, #tpu.memory_space<vmem>>, %arg14: memref<8x16xf32, #tpu.memory_space<vmem>>) attributes {dimension_semantics = [#tpu.dimension_semantics<parallel>], iteration_bounds = array<i64: 1>, scalar_prefetch = 0 : i64, scratch_operands = 2 : i64, tpu.core_type = #tpu.core_type<tc>, window_params = [{transform_indices = @transform_0, window_bounds = array<i64: 8, 256>}, {pipeline_mode = #tpu.pipeline_mode<synchronous>, transform_indices = @transform_1, window_bounds = array<i64: 16, 4>}, {pipeline_mode = #tpu.pipeline_mode<synchronous>, transform_indices = @transform_2, window_bounds = array<i64: 16, 1>}, {pipeline_mode = #tpu.pipeline_mode<synchronous>, transform_indices = @transform_3, window_bounds = array<i64: 4, 16>}, {pipeline_mode = #tpu.pipeline_mode<synchronous>, transform_indices = @transform_4, window_bounds = array<i64: 4, 1>}, {pipeline_mode = #tpu.pipeline_mode<synchronous>, transform_indices = @transform_5, window_bounds = array<i64: 4, 16>}, {pipeline_mode = #tpu.pipeline_mode<synchronous>, transform_indices = @transform_6, window_bounds = array<i64: 4, 1>}, {pipeline_mode = #tpu.pipeline_mode<synchronous>, transform_indices = @transform_7, window_bounds = array<i64: 256, 32>}, {pipeline_mode = #tpu.pipeline_mode<synchronous>, transform_indices = @transform_8, window_bounds = array<i64: 1, 32>}, {pipeline_mode = #tpu.pipeline_mode<synchronous>, transform_indices = @transform_9, window_bounds = array<i64: 16, 256>}, {pipeline_mode = #tpu.pipeline_mode<synchronous>, transform_indices = @transform_10, window_bounds = array<i64: 16, 256>}, {transform_indices = @transform_11, window_bounds = array<i64: 8, 256>}]} {
    %c0 = arith.constant 0 : index
    %c0_0 = arith.constant 0 : index
    %0 = vector.load %arg1[%c0, %c0_0] : memref<8x256xf32, #tpu.memory_space<vmem>>, vector<8x256xf32>
    %c0_1 = arith.constant 0 : index
    %c0_2 = arith.constant 0 : index
    %1 = vector.load %arg8[%c0_1, %c0_2] : memref<256x32xf32, #tpu.memory_space<vmem>>, vector<256x32xf32>
    %cst = arith.constant dense<0.000000e+00> : vector<8x32xf32>
    %2 = tpu.matmul %0, %1, %cst {dimension_numbers = #tpu.dot_dimension_numbers<[1], [0], [0], [1], [0, 0, 1, 1], [], []>} : vector<8x256xf32>, vector<256x32xf32>, vector<8x32xf32> -> vector<8x32xf32>
    %c0_3 = arith.constant 0 : index
    %c0_4 = arith.constant 0 : index
    %3 = vector.load %arg9[%c0_3, %c0_4] : memref<1x32xf32, #tpu.memory_space<vmem>>, vector<1x32xf32>
    %4 = vector.broadcast %3 : vector<1x32xf32> to vector<8x32xf32>
    %5 = arith.mulf %2, %4 : vector<8x32xf32>
    %c0_5 = arith.constant 0 : index
    %c0_6 = arith.constant 0 : index
    %6 = vector.load %arg2[%c0_5, %c0_6] : memref<16x4xf32, #tpu.memory_space<vmem>>, vector<16x4xf32>
    %c0_7 = arith.constant 0 : index
    %c0_8 = arith.constant 0 : index
    %7 = vector.load %arg3[%c0_7, %c0_8] : memref<16x1xf32, #tpu.memory_space<vmem>>, vector<16x1xf32>
    %c0_9 = arith.constant 0 : index
    %c0_10 = arith.constant 0 : index
    %8 = vector.load %arg4[%c0_9, %c0_10] : memref<4x16xf32, #tpu.memory_space<vmem>>, vector<4x16xf32>
    %c0_11 = arith.constant 0 : index
    %c0_12 = arith.constant 0 : index
    %9 = vector.load %arg5[%c0_11, %c0_12] : memref<4x1xf32, #tpu.memory_space<vmem>>, vector<4x1xf32>
    %c0_13 = arith.constant 0 : index
    %c0_14 = arith.constant 0 : index
    %10 = vector.load %arg6[%c0_13, %c0_14] : memref<4x16xf32, #tpu.memory_space<vmem>>, vector<4x16xf32>
    %c0_15 = arith.constant 0 : index
    %c0_16 = arith.constant 0 : index
    %11 = vector.load %arg7[%c0_15, %c0_16] : memref<4x1xf32, #tpu.memory_space<vmem>>, vector<4x1xf32>
    %12 = vector.extract_strided_slice %5 {offsets = [0, 0], sizes = [4, 32], strides = [1, 1]} : vector<8x32xf32> to vector<4x32xf32>
    %cst_17 = arith.constant dense<0.000000e+00> : vector<16x32xf32>
    %13 = tpu.matmul %6, %12, %cst_17 {dimension_numbers = #tpu.dot_dimension_numbers<[1], [0], [0], [1], [0, 0, 1, 1], [], []>} : vector<16x4xf32>, vector<4x32xf32>, vector<16x32xf32> -> vector<16x32xf32>
    %14 = vector.broadcast %7 : vector<16x1xf32> to vector<16x32xf32>
    %15 = arith.addf %13, %14 : vector<16x32xf32>
    %cst_18 = arith.constant dense<0.000000e+00> : vector<16xf32>
    %16 = vector.multi_reduction <add>, %15, %cst_18 [1] : vector<16x32xf32> to vector<16xf32>
    %17 = vector.shape_cast %16 : vector<16xf32> to vector<16x1xf32>
    %cst_19 = arith.constant 3.200000e+01 : f32
    %18 = vector.broadcast %cst_19 : f32 to vector<16x1xf32>
    %19 = arith.divf %17, %18 : vector<16x1xf32>
    %20 = vector.broadcast %19 : vector<16x1xf32> to vector<16x32xf32>
    %21 = arith.subf %15, %20 : vector<16x32xf32>
    %22 = vector.broadcast %19 : vector<16x1xf32> to vector<16x32xf32>
    %23 = arith.subf %15, %22 : vector<16x32xf32>
    %24 = arith.mulf %21, %23 : vector<16x32xf32>
    %cst_20 = arith.constant dense<0.000000e+00> : vector<16xf32>
    %25 = vector.multi_reduction <add>, %24, %cst_20 [1] : vector<16x32xf32> to vector<16xf32>
    %26 = vector.shape_cast %25 : vector<16xf32> to vector<16x1xf32>
    %cst_21 = arith.constant 3.200000e+01 : f32
    %27 = vector.broadcast %cst_21 : f32 to vector<16x1xf32>
    %28 = arith.divf %26, %27 : vector<16x1xf32>
    %29 = vector.broadcast %19 : vector<16x1xf32> to vector<16x32xf32>
    %30 = arith.subf %15, %29 : vector<16x32xf32>
    %cst_22 = arith.constant 9.99999974E-6 : f32
    %31 = vector.broadcast %cst_22 : f32 to vector<16x1xf32>
    %32 = arith.addf %28, %31 : vector<16x1xf32>
    %33 = math.rsqrt %32 : vector<16x1xf32>
    %34 = vector.broadcast %33 : vector<16x1xf32> to vector<16x32xf32>
    %35 = arith.mulf %30, %34 : vector<16x32xf32>
    %cst_23 = arith.constant 3.000000e+00 : f32
    %36 = vector.broadcast %cst_23 : f32 to vector<16x32xf32>
    %37 = arith.addf %35, %36 : vector<16x32xf32>
    %cst_24 = arith.constant 0.000000e+00 : f32
    %cst_25 = arith.constant 6.000000e+00 : f32
    %38 = vector.broadcast %cst_24 : f32 to vector<16x32xf32>
    %39 = arith.maximumf %38, %37 : vector<16x32xf32>
    %40 = vector.broadcast %cst_25 : f32 to vector<16x32xf32>
    %41 = arith.minimumf %40, %39 : vector<16x32xf32>
    %cst_26 = arith.constant 0.166666672 : f32
    %42 = vector.broadcast %cst_26 : f32 to vector<16x32xf32>
    %43 = arith.mulf %41, %42 : vector<16x32xf32>
    %44 = arith.mulf %35, %43 : vector<16x32xf32>
    %45 = vector.extract_strided_slice %44 {offsets = [0, 0], sizes = [16, 16], strides = [1, 1]} : vector<16x32xf32> to vector<16x16xf32>
    %cst_27 = arith.constant dense<0.000000e+00> : vector<4x16xf32>
    %46 = tpu.matmul %8, %45, %cst_27 {dimension_numbers = #tpu.dot_dimension_numbers<[1], [0], [0], [1], [0, 0, 1, 1], [], []>} : vector<4x16xf32>, vector<16x16xf32>, vector<4x16xf32> -> vector<4x16xf32>
    %47 = vector.broadcast %9 : vector<4x1xf32> to vector<4x16xf32>
    %48 = arith.addf %46, %47 : vector<4x16xf32>
    %49 = arith.negf %48 : vector<4x16xf32>
    %50 = math.exp %49 : vector<4x16xf32>
    %cst_28 = arith.constant 1.000000e+00 : f32
    %51 = vector.broadcast %cst_28 : f32 to vector<4x16xf32>
    %52 = arith.addf %51, %50 : vector<4x16xf32>
    %53 = arith.divf %51, %52 : vector<4x16xf32>
    %54 = vector.extract_strided_slice %44 {offsets = [0, 16], sizes = [16, 16], strides = [1, 1]} : vector<16x32xf32> to vector<16x16xf32>
    %cst_29 = arith.constant dense<0.000000e+00> : vector<4x16xf32>
    %55 = tpu.matmul %10, %54, %cst_29 {dimension_numbers = #tpu.dot_dimension_numbers<[1], [0], [0], [1], [0, 0, 1, 1], [], []>} : vector<4x16xf32>, vector<16x16xf32>, vector<4x16xf32> -> vector<4x16xf32>
    %56 = vector.broadcast %11 : vector<4x1xf32> to vector<4x16xf32>
    %57 = arith.addf %55, %56 : vector<4x16xf32>
    %58 = arith.negf %57 : vector<4x16xf32>
    %59 = math.exp %58 : vector<4x16xf32>
    %cst_30 = arith.constant 1.000000e+00 : f32
    %60 = vector.broadcast %cst_30 : f32 to vector<4x16xf32>
    %61 = arith.addf %60, %59 : vector<4x16xf32>
    %62 = arith.divf %60, %61 : vector<4x16xf32>
    %c0_31 = arith.constant 0 : index
    %c0_32 = arith.constant 0 : index
    %63 = vector.load %arg13[%c0_31, %c0_32] : memref<8x16xf32, #tpu.memory_space<vmem>>, vector<4x16xf32>
    tpu.vector_store %arg13[%c0_31, %c0_32], %53 {strides = array<i32>} : memref<8x16xf32, #tpu.memory_space<vmem>>, vector<4x16xf32>,
    %c0_33 = arith.constant 0 : index
    %c0_34 = arith.constant 0 : index
    %64 = vector.load %arg14[%c0_33, %c0_34] : memref<8x16xf32, #tpu.memory_space<vmem>>, vector<4x16xf32>
    tpu.vector_store %arg14[%c0_33, %c0_34], %62 {strides = array<i32>} : memref<8x16xf32, #tpu.memory_space<vmem>>, vector<4x16xf32>,
    %65 = vector.extract_strided_slice %5 {offsets = [4, 0], sizes = [4, 32], strides = [1, 1]} : vector<8x32xf32> to vector<4x32xf32>
    %cst_35 = arith.constant dense<0.000000e+00> : vector<16x32xf32>
    %66 = tpu.matmul %6, %65, %cst_35 {dimension_numbers = #tpu.dot_dimension_numbers<[1], [0], [0], [1], [0, 0, 1, 1], [], []>} : vector<16x4xf32>, vector<4x32xf32>, vector<16x32xf32> -> vector<16x32xf32>
    %67 = vector.broadcast %7 : vector<16x1xf32> to vector<16x32xf32>
    %68 = arith.addf %66, %67 : vector<16x32xf32>
    %cst_36 = arith.constant dense<0.000000e+00> : vector<16xf32>
    %69 = vector.multi_reduction <add>, %68, %cst_36 [1] : vector<16x32xf32> to vector<16xf32>
    %70 = vector.shape_cast %69 : vector<16xf32> to vector<16x1xf32>
    %cst_37 = arith.constant 3.200000e+01 : f32
    %71 = vector.broadcast %cst_37 : f32 to vector<16x1xf32>
    %72 = arith.divf %70, %71 : vector<16x1xf32>
    %73 = vector.broadcast %72 : vector<16x1xf32> to vector<16x32xf32>
    %74 = arith.subf %68, %73 : vector<16x32xf32>
    %75 = vector.broadcast %72 : vector<16x1xf32> to vector<16x32xf32>
    %76 = arith.subf %68, %75 : vector<16x32xf32>
    %77 = arith.mulf %74, %76 : vector<16x32xf32>
    %cst_38 = arith.constant dense<0.000000e+00> : vector<16xf32>
    %78 = vector.multi_reduction <add>, %77, %cst_38 [1] : vector<16x32xf32> to vector<16xf32>
    %79 = vector.shape_cast %78 : vector<16xf32> to vector<16x1xf32>
    %cst_39 = arith.constant 3.200000e+01 : f32
    %80 = vector.broadcast %cst_39 : f32 to vector<16x1xf32>
    %81 = arith.divf %79, %80 : vector<16x1xf32>
    %82 = vector.broadcast %72 : vector<16x1xf32> to vector<16x32xf32>
    %83 = arith.subf %68, %82 : vector<16x32xf32>
    %cst_40 = arith.constant 9.99999974E-6 : f32
    %84 = vector.broadcast %cst_40 : f32 to vector<16x1xf32>
    %85 = arith.addf %81, %84 : vector<16x1xf32>
    %86 = math.rsqrt %85 : vector<16x1xf32>
    %87 = vector.broadcast %86 : vector<16x1xf32> to vector<16x32xf32>
    %88 = arith.mulf %83, %87 : vector<16x32xf32>
    %cst_41 = arith.constant 3.000000e+00 : f32
    %89 = vector.broadcast %cst_41 : f32 to vector<16x32xf32>
    %90 = arith.addf %88, %89 : vector<16x32xf32>
    %cst_42 = arith.constant 0.000000e+00 : f32
    %cst_43 = arith.constant 6.000000e+00 : f32
    %91 = vector.broadcast %cst_42 : f32 to vector<16x32xf32>
    %92 = arith.maximumf %91, %90 : vector<16x32xf32>
    %93 = vector.broadcast %cst_43 : f32 to vector<16x32xf32>
    %94 = arith.minimumf %93, %92 : vector<16x32xf32>
    %cst_44 = arith.constant 0.166666672 : f32
    %95 = vector.broadcast %cst_44 : f32 to vector<16x32xf32>
    %96 = arith.mulf %94, %95 : vector<16x32xf32>
    %97 = arith.mulf %88, %96 : vector<16x32xf32>
    %98 = vector.extract_strided_slice %97 {offsets = [0, 0], sizes = [16, 16], strides = [1, 1]} : vector<16x32xf32> to vector<16x16xf32>
    %cst_45 = arith.constant dense<0.000000e+00> : vector<4x16xf32>
    %99 = tpu.matmul %8, %98, %cst_45 {dimension_numbers = #tpu.dot_dimension_numbers<[1], [0], [0], [1], [0, 0, 1, 1], [], []>} : vector<4x16xf32>, vector<16x16xf32>, vector<4x16xf32> -> vector<4x16xf32>
    %100 = vector.broadcast %9 : vector<4x1xf32> to vector<4x16xf32>
    %101 = arith.addf %99, %100 : vector<4x16xf32>
    %102 = arith.negf %101 : vector<4x16xf32>
    %103 = math.exp %102 : vector<4x16xf32>
    %cst_46 = arith.constant 1.000000e+00 : f32
    %104 = vector.broadcast %cst_46 : f32 to vector<4x16xf32>
    %105 = arith.addf %104, %103 : vector<4x16xf32>
    %106 = arith.divf %104, %105 : vector<4x16xf32>
    %107 = vector.extract_strided_slice %97 {offsets = [0, 16], sizes = [16, 16], strides = [1, 1]} : vector<16x32xf32> to vector<16x16xf32>
    %cst_47 = arith.constant dense<0.000000e+00> : vector<4x16xf32>
    %108 = tpu.matmul %10, %107, %cst_47 {dimension_numbers = #tpu.dot_dimension_numbers<[1], [0], [0], [1], [0, 0, 1, 1], [], []>} : vector<4x16xf32>, vector<16x16xf32>, vector<4x16xf32> -> vector<4x16xf32>
    %109 = vector.broadcast %11 : vector<4x1xf32> to vector<4x16xf32>
    %110 = arith.addf %108, %109 : vector<4x16xf32>
    %111 = arith.negf %110 : vector<4x16xf32>
    %112 = math.exp %111 : vector<4x16xf32>
    %cst_48 = arith.constant 1.000000e+00 : f32
    %113 = vector.broadcast %cst_48 : f32 to vector<4x16xf32>
    %114 = arith.addf %113, %112 : vector<4x16xf32>
    %115 = arith.divf %113, %114 : vector<4x16xf32>
    %c4 = arith.constant 4 : index
    %c0_49 = arith.constant 0 : index
    %116 = vector.load %arg13[%c4, %c0_49] : memref<8x16xf32, #tpu.memory_space<vmem>>, vector<4x16xf32>
    tpu.vector_store %arg13[%c4, %c0_49], %106 {strides = array<i32>} : memref<8x16xf32, #tpu.memory_space<vmem>>, vector<4x16xf32>,
    %c4_50 = arith.constant 4 : index
    %c0_51 = arith.constant 0 : index
    %117 = vector.load %arg14[%c4_50, %c0_51] : memref<8x16xf32, #tpu.memory_space<vmem>>, vector<4x16xf32>
    tpu.vector_store %arg14[%c4_50, %c0_51], %115 {strides = array<i32>} : memref<8x16xf32, #tpu.memory_space<vmem>>, vector<4x16xf32>,
    %c0_52 = arith.constant 0 : index
    %c0_53 = arith.constant 0 : index
    %118 = vector.load %arg13[%c0_52, %c0_53] : memref<8x16xf32, #tpu.memory_space<vmem>>, vector<8x16xf32>
    %c0_54 = arith.constant 0 : index
    %c0_55 = arith.constant 0 : index
    %119 = vector.load %arg10[%c0_54, %c0_55] : memref<16x256xf32, #tpu.memory_space<vmem>>, vector<16x256xf32>
    %cst_56 = arith.constant dense<0.000000e+00> : vector<8x256xf32>
    %120 = tpu.matmul %118, %119, %cst_56 {dimension_numbers = #tpu.dot_dimension_numbers<[1], [0], [0], [1], [0, 0, 1, 1], [], []>} : vector<8x16xf32>, vector<16x256xf32>, vector<8x256xf32> -> vector<8x256xf32>
    %c0_57 = arith.constant 0 : index
    %c0_58 = arith.constant 0 : index
    %121 = vector.load %arg14[%c0_57, %c0_58] : memref<8x16xf32, #tpu.memory_space<vmem>>, vector<8x16xf32>
    %c0_59 = arith.constant 0 : index
    %c0_60 = arith.constant 0 : index
    %122 = vector.load %arg11[%c0_59, %c0_60] : memref<16x256xf32, #tpu.memory_space<vmem>>, vector<16x256xf32>
    %cst_61 = arith.constant dense<0.000000e+00> : vector<8x256xf32>
    %123 = tpu.matmul %121, %122, %cst_61 {dimension_numbers = #tpu.dot_dimension_numbers<[1], [0], [0], [1], [0, 0, 1, 1], [], []>} : vector<8x16xf32>, vector<16x256xf32>, vector<8x256xf32> -> vector<8x256xf32>
    %124 = arith.mulf %120, %123 : vector<8x256xf32>
    %cst_62 = arith.constant 1.000000e+00 : f32
    %125 = vector.broadcast %cst_62 : f32 to vector<8x256xf32>
    %126 = arith.addf %124, %125 : vector<8x256xf32>
    %c0_63 = arith.constant 0 : index
    %c0_64 = arith.constant 0 : index
    %127 = vector.load %arg1[%c0_63, %c0_64] : memref<8x256xf32, #tpu.memory_space<vmem>>, vector<8x256xf32>
    %128 = arith.mulf %127, %126 : vector<8x256xf32>
    %c0_65 = arith.constant 0 : index
    %c0_66 = arith.constant 0 : index
    %129 = vector.load %arg12[%c0_65, %c0_66] : memref<8x256xf32, #tpu.memory_space<vmem>>, vector<8x256xf32>
    tpu.vector_store %arg12[%c0_65, %c0_66], %128 {strides = array<i32>} : memref<8x256xf32, #tpu.memory_space<vmem>>, vector<8x256xf32>,
    return
  }
  func.func @transform_0(%arg0: i32) -> (i32, i32) {
    %c0_i32 = arith.constant 0 : i32
    %c0_i32_0 = arith.constant 0 : i32
    return %arg0, %c0_i32 : i32, i32
  }
  func.func @transform_1(%arg0: i32) -> (i32, i32) {
    %c0_i32 = arith.constant 0 : i32
    %c0_i32_0 = arith.constant 0 : i32
    %c0_i32_1 = arith.constant 0 : i32
    return %c0_i32, %c0_i32_0 : i32, i32
  }
  func.func @transform_2(%arg0: i32) -> (i32, i32) {
    %c0_i32 = arith.constant 0 : i32
    %c0_i32_0 = arith.constant 0 : i32
    %c0_i32_1 = arith.constant 0 : i32
    return %c0_i32, %c0_i32_0 : i32, i32
  }
  func.func @transform_3(%arg0: i32) -> (i32, i32) {
    %c0_i32 = arith.constant 0 : i32
    %c0_i32_0 = arith.constant 0 : i32
    %c0_i32_1 = arith.constant 0 : i32
    return %c0_i32, %c0_i32_0 : i32, i32
  }
  func.func @transform_4(%arg0: i32) -> (i32, i32) {
    %c0_i32 = arith.constant 0 : i32
    %c0_i32_0 = arith.constant 0 : i32
    %c0_i32_1 = arith.constant 0 : i32
    return %c0_i32, %c0_i32_0 : i32, i32
  }
  func.func @transform_5(%arg0: i32) -> (i32, i32) {
    %c0_i32 = arith.constant 0 : i32
    %c0_i32_0 = arith.constant 0 : i32
    %c0_i32_1 = arith.constant 0 : i32
    return %c0_i32, %c0_i32_0 : i32, i32
  }
  func.func @transform_6(%arg0: i32) -> (i32, i32) {
    %c0_i32 = arith.constant 0 : i32
    %c0_i32_0 = arith.constant 0 : i32
    %c0_i32_1 = arith.constant 0 : i32
    return %c0_i32, %c0_i32_0 : i32, i32
  }
  func.func @transform_7(%arg0: i32) -> (i32, i32) {
    %c0_i32 = arith.constant 0 : i32
    %c0_i32_0 = arith.constant 0 : i32
    %c0_i32_1 = arith.constant 0 : i32
    return %c0_i32, %c0_i32_0 : i32, i32
  }
  func.func @transform_8(%arg0: i32) -> (i32, i32) {
    %c0_i32 = arith.constant 0 : i32
    %c0_i32_0 = arith.constant 0 : i32
    %c0_i32_1 = arith.constant 0 : i32
    return %c0_i32, %c0_i32_0 : i32, i32
  }
  func.func @transform_9(%arg0: i32) -> (i32, i32) {
    %c0_i32 = arith.constant 0 : i32
    %c0_i32_0 = arith.constant 0 : i32
    %c0_i32_1 = arith.constant 0 : i32
    return %c0_i32, %c0_i32_0 : i32, i32
  }
  func.func @transform_10(%arg0: i32) -> (i32, i32) {
    %c0_i32 = arith.constant 0 : i32
    %c0_i32_0 = arith.constant 0 : i32
    %c0_i32_1 = arith.constant 0 : i32
    return %c0_i32, %c0_i32_0 : i32, i32
  }
  func.func @transform_11(%arg0: i32) -> (i32, i32) {
    %c0_i32 = arith.constant 0 : i32
    %c0_i32_0 = arith.constant 0 : i32
    return %arg0, %c0_i32 : i32, i32
  }
}

</mosaic_0001>

<llo_original>
// kernel: tpu_custom_call.1
$region0: #{tpu_custom_call.1}
  #allocation0 [shape = 'u32[]', space=smem, size = 0x4, offset = 0x4, fixed_abs, tag = 'smem constant byte address 0x4 - core index']
  #allocation1 [shape = 'u32[144,128]{1,0:T(1,128)}', space=vmem, size = 0x12000, scoped, tag = 'internal scratch']
  #allocation2 [shape = 'f32[8,16]{1,0:T(8,128)}', space=vmem, size = 0x1000, scoped, tag = 'scratch operand']
  #allocation3 [shape = 'f32[8,16]{1,0:T(8,128)}', space=vmem, size = 0x1000, scoped, tag = 'scratch operand']
  %s0 = inlined_call_operand.vmem [shape: f32[8,256], index: 0, kind: input, shape index: {}]
  %s1 = inlined_call_operand.vmem [shape: f32[16,4], index: 1, kind: input, shape index: {}]
  %s2 = inlined_call_operand.vmem [shape: f32[16,1], index: 2, kind: input, shape index: {}]
  %s3 = inlined_call_operand.vmem [shape: f32[4,16], index: 3, kind: input, shape index: {}]
  %s4 = inlined_call_operand.vmem [shape: f32[4,1], index: 4, kind: input, shape index: {}]
  %s5 = inlined_call_operand.vmem [shape: f32[4,16], index: 5, kind: input, shape index: {}]
  %s6 = inlined_call_operand.vmem [shape: f32[4,1], index: 6, kind: input, shape index: {}]
  %s7 = inlined_call_operand.vmem [shape: f32[256,32], index: 7, kind: input, shape index: {}]
  %s8 = inlined_call_operand.vmem [shape: f32[1,32], index: 8, kind: input, shape index: {}]
  %s9 = inlined_call_operand.vmem [shape: f32[16,256], index: 9, kind: input, shape index: {}]
  %s10 = inlined_call_operand.vmem [shape: f32[16,256], index: 10, kind: input, shape index: {}]
  %s11 = inlined_call_operand.hbm [shape: f32[8,256], index: 11, kind: output, shape index: {}]
  %s12 = sld [smem:[#allocation0]]
  $region54: #{tpu_custom_call.1} parent=0
    _
  %s14 = ssub.s32 1, %s12
  %s15 = scalar_select 0, %s14, %s12
  $region1: #{tpu_custom_call.1} parent=0
    #allocation4 [shape = 'u8[8192]{0}', space=vmem, size = 0x2000, scoped, tag = 'output window, operand 0, single buffered']
    #allocation5 [shape = 's32[1]{0}', space=sflag, size = 0x4, scoped, tag = 'scoped memory for tpu_custom_call.1']
    %16 = vsyncpa [#allocation5], 0
    // Predicated region
    $region2: #{tpu_custom_call.1} parent=1 // pred_check
      _
    $region3: #{tpu_custom_call.1} parent=1 // pred_check_branch
      %18 = sbr.rel (0) target = $region5
    $region4: #{tpu_custom_call.1} parent=1 // pred_region
      _
    $region5: #{tpu_custom_call.1} parent=1 // pred_fallthru
      _
    // Predicated region
    $region6: #{tpu_custom_call.1} parent=1 // pred_check
      _
    $region7: #{tpu_custom_call.1} parent=1 // pred_check_branch
      %20 = sbr.rel (0) target = $region9
    $region8: #{tpu_custom_call.1} parent=1 // pred_region
      _
    $region9: #{tpu_custom_call.1} parent=1 // pred_fallthru
      _
    // Predicated region
    $region10: #{tpu_custom_call.1} parent=1 // pred_check
      _
    $region11: #{tpu_custom_call.1} parent=1 // pred_check_branch
      %22 = sbr.rel (0) target = $region13
    $region12: #{tpu_custom_call.1} parent=1 // pred_region
      _
    $region13: #{tpu_custom_call.1} parent=1 // pred_fallthru
      _
    // Predicated region
    $region14: #{tpu_custom_call.1} parent=1 // pred_check
      _
    $region15: #{tpu_custom_call.1} parent=1 // pred_check_branch
      %24 = sbr.rel (0) target = $region17
    $region16: #{tpu_custom_call.1} parent=1 // pred_region
      _
    $region17: #{tpu_custom_call.1} parent=1 // pred_fallthru
      _
    // Predicated region
    $region18: #{tpu_custom_call.1} parent=1 // pred_check
      _
    $region19: #{tpu_custom_call.1} parent=1 // pred_check_branch
      %26 = sbr.rel (0) target = $region21
    $region20: #{tpu_custom_call.1} parent=1 // pred_region
      _
    $region21: #{tpu_custom_call.1} parent=1 // pred_fallthru
      _
    // Predicated region
    $region22: #{tpu_custom_call.1} parent=1 // pred_check
      _
    $region23: #{tpu_custom_call.1} parent=1 // pred_check_branch
      %28 = sbr.rel (0) target = $region25
    $region24: #{tpu_custom_call.1} parent=1 // pred_region
      _
    $region25: #{tpu_custom_call.1} parent=1 // pred_fallthru
      _
    // Predicated region
    $region26: #{tpu_custom_call.1} parent=1 // pred_check
      _
    $region27: #{tpu_custom_call.1} parent=1 // pred_check_branch
      %30 = sbr.rel (0) target = $region29
    $region28: #{tpu_custom_call.1} parent=1 // pred_region
      _
    $region29: #{tpu_custom_call.1} parent=1 // pred_fallthru
      _
    // Predicated region
    $region30: #{tpu_custom_call.1} parent=1 // pred_check
      _
    $region31: #{tpu_custom_call.1} parent=1 // pred_check_branch
      %32 = sbr.rel (0) target = $region33
    $region32: #{tpu_custom_call.1} parent=1 // pred_region
      _
    $region33: #{tpu_custom_call.1} parent=1 // pred_fallthru
      _
    // Predicated region
    $region34: #{tpu_custom_call.1} parent=1 // pred_check
      _
    $region35: #{tpu_custom_call.1} parent=1 // pred_check_branch
      %34 = sbr.rel (0) target = $region37
    $region36: #{tpu_custom_call.1} parent=1 // pred_region
      _
    $region37: #{tpu_custom_call.1} parent=1 // pred_fallthru
      _
    // Predicated region
    $region38: #{tpu_custom_call.1} parent=1 // pred_check
      _
    $region39: #{tpu_custom_call.1} parent=1 // pred_check_branch
      %36 = sbr.rel (0) target = $region41
    $region40: #{tpu_custom_call.1} parent=1 // pred_region
      _
    $region41: #{tpu_custom_call.1} parent=1 // pred_fallthru
      _
    // Predicated region
    $region42: #{tpu_custom_call.1} parent=1 // pred_check
      _
    $region43: #{tpu_custom_call.1} parent=1 // pred_check_branch
      %38 = sbr.rel (0) target = $region45
    $region44: #{tpu_custom_call.1} parent=1 // pred_region
      _
    $region45: #{tpu_custom_call.1} parent=1 // pred_fallthru
      _
    %v39 = vld [vmem:[%s0] sm:$0xff]
    %v40 = vld [vmem:[%s0 + $0x8] sm:$0xff]
    %v41 = vld [vmem:[%s7] sm:$0xff]
    %v42 = vld [vmem:[%s7 + $0x8] sm:$0xff]
    %v43 = vld [vmem:[%s7 + $0x10] sm:$0xff]
    %v44 = vld [vmem:[%s7 + $0x18] sm:$0xff]
    %v45 = vld [vmem:[%s7 + $0x20] sm:$0xff]
    %v46 = vld [vmem:[%s7 + $0x28] sm:$0xff]
    %v47 = vld [vmem:[%s7 + $0x30] sm:$0xff]
    %v48 = vld [vmem:[%s7 + $0x38] sm:$0xff]
    %v49 = vld [vmem:[%s7 + $0x40] sm:$0xff]
    %v50 = vld [vmem:[%s7 + $0x48] sm:$0xff]
    %v51 = vld [vmem:[%s7 + $0x50] sm:$0xff]
    %v52 = vld [vmem:[%s7 + $0x58] sm:$0xff]
    %v53 = vld [vmem:[%s7 + $0x60] sm:$0xff]
    %v54 = vld [vmem:[%s7 + $0x68] sm:$0xff]
    %v55 = vld [vmem:[%s7 + $0x70] sm:$0xff]
    %v56 = vld [vmem:[%s7 + $0x78] sm:$0xff]
    %v57 = vld [vmem:[%s7 + $0x80] sm:$0xff]
    %v58 = vld [vmem:[%s7 + $0x88] sm:$0xff]
    %v59 = vld [vmem:[%s7 + $0x90] sm:$0xff]
    %v60 = vld [vmem:[%s7 + $0x98] sm:$0xff]
    %v61 = vld [vmem:[%s7 + $0xa0] sm:$0xff]
    %v62 = vld [vmem:[%s7 + $0xa8] sm:$0xff]
    %v63 = vld [vmem:[%s7 + $0xb0] sm:$0xff]
    %v64 = vld [vmem:[%s7 + $0xb8] sm:$0xff]
    %v65 = vld [vmem:[%s7 + $0xc0] sm:$0xff]
    %v66 = vld [vmem:[%s7 + $0xc8] sm:$0xff]
    %v67 = vld [vmem:[%s7 + $0xd0] sm:$0xff]
    %v68 = vld [vmem:[%s7 + $0xd8] sm:$0xff]
    %v69 = vld [vmem:[%s7 + $0xe0] sm:$0xff]
    %v70 = vld [vmem:[%s7 + $0xe8] sm:$0xff]
    %v71 = vld [vmem:[%s7 + $0xf0] sm:$0xff]
    %v72 = vld [vmem:[%s7 + $0xf8] sm:$0xff]
    %73 = vmatprep.subr.mxu0 0.0
    %74 = vmatpush1.msra.mxu0 %v41
    %75 = vmatprep.subr.mxu0 0.0
    %76 = vmatpush1.msra.mxu0 %v42
    %77 = vmatprep.subr.mxu0 0.0
    %78 = vmatpush1.msra.mxu0 %v43
    %79 = vmatprep.subr.mxu0 0.0
    %80 = vmatpush1.msra.mxu0 %v44
    %81 = vmatprep.subr.mxu0 0.0
    %82 = vmatpush1.msra.mxu0 %v45
    %83 = vmatprep.subr.mxu0 0.0
    %84 = vmatpush1.msra.mxu0 %v46
    %85 = vmatprep.subr.mxu0 0.0
    %86 = vmatpush1.msra.mxu0 %v47
    %87 = vmatprep.subr.mxu0 0.0
    %88 = vmatpush1.msra.mxu0 %v48
    %89 = vmatprep.subr.mxu0 0.0
    %90 = vmatpush1.msra.mxu0 %v49
    %91 = vmatprep.subr.mxu0 0.0
    %92 = vmatpush1.msra.mxu0 %v50
    %93 = vmatprep.subr.mxu0 0.0
    %94 = vmatpush1.msra.mxu0 %v51
    %95 = vmatprep.subr.mxu0 0.0
    %96 = vmatpush1.msra.mxu0 %v52
    %97 = vmatprep.subr.mxu0 0.0
    %98 = vmatpush1.msra.mxu0 %v53
    %99 = vmatprep.subr.mxu0 0.0
    %100 = vmatpush1.msra.mxu0 %v54
    %101 = vmatprep.subr.mxu0 0.0
    %102 = vmatpush1.msra.mxu0 %v55
    %103 = vmatprep.subr.mxu0 0.0
    %104 = vmatpush1.msra.mxu0 %v56
    %105 = vmatprep.subr.mxu0 0.0
    %106 = vmatpush1.msra.mxu0 %v57
    %107 = vmatprep.subr.mxu0 0.0
    %108 = vmatpush1.msra.mxu0 %v58
    %109 = vmatprep.subr.mxu0 0.0
    %110 = vmatpush1.msra.mxu0 %v59
    %111 = vmatprep.subr.mxu0 0.0
    %112 = vmatpush1.msra.mxu0 %v60
    %113 = vmatprep.subr.mxu0 0.0
    %114 = vmatpush1.msra.mxu0 %v61
    %115 = vmatprep.subr.mxu0 0.0
    %116 = vmatpush1.msra.mxu0 %v62
    %117 = vmatprep.subr.mxu0 0.0
    %118 = vmatpush1.msra.mxu0 %v63
    %119 = vmatprep.subr.mxu0 0.0
    %120 = vmatpush1.msra.mxu0 %v64
    %121 = vmatprep.subr.mxu0 0.0
    %122 = vmatpush1.msra.mxu0 %v65
    %123 = vmatprep.subr.mxu0 0.0
    %124 = vmatpush1.msra.mxu0 %v66
    %125 = vmatprep.subr.mxu0 0.0
    %126 = vmatpush1.msra.mxu0 %v67
    %127 = vmatprep.subr.mxu0 0.0
    %128 = vmatpush1.msra.mxu0 %v68
    %129 = vmatprep.subr.mxu0 0.0
    %130 = vmatpush1.msra.mxu0 %v69
    %131 = vmatprep.subr.mxu0 0.0
    %132 = vmatpush1.msra.mxu0 %v70
    %133 = vmatprep.subr.mxu0 0.0
    %134 = vmatpush1.msra.mxu0 %v71
    %135 = vmatprep.subr.mxu0 0.0
    %136 = vmatpush1.msra.mxu0 %v72
    %137 = vmatprep.mubr.f32.mxu0 %v40
    %138 = vmatmul.mubr.f32.gmra.mrb[0].mxu0 %v39
    %v139 = vpop.f32.mrb[0].mxu0
    %v140 = vadd.f32 0.0, %v139
    %v141 = vpop.f32.mrb[0].mxu0
    %142 = vdwg.mxu0
    %v143 = vld [vmem:[%s8] sm:$0x1]
    %v145 = vlaneseq
    %v146 = vshrl.u32 %v145, 7
    %v147 = vsub.s32 0, %v146
    %v148 = vrot.slane %v143, %v147
    %v150 = vmul.f32 %v140, %v148
    %v151 = vld [vmem:[%s1] sm:$0xff]
    %v152 = vld [vmem:[%s1 + $0x8] sm:$0xff]
    %v153 = vld [vmem:[%s2] sm:$0xff]
    %v154 = vld [vmem:[%s2 + $0x8] sm:$0xff]
    %v155 = vld [vmem:[%s3] sm:$0xf]
    %v156 = vld [vmem:[%s4] sm:$0xf]
    %v157 = vld [vmem:[%s5] sm:$0xf]
    %v158 = vld [vmem:[%s6] sm:$0xf]
    %160 = vset.pattern.permute.xlu0 0
    %161 = vperm.xlu0 %160, %v153
    %v162 = vpop.permute.xlu0 %161
    %165 = vset.pattern.permute.xlu0 0
    %166 = vperm.xlu0 %165, %v154
    %v167 = vpop.permute.xlu0 %166
    %vm169 = vcmask 31744
    %v171 = vsel %vm169, %v151, 0
    %v174 = vsel %vm169, %v152, 0
    %vm176 = vcmask 1043456
    %v178 = vsel %vm176, %v150, 0
    %180 = vmatprep.subr.mxu0 0.0
    %181 = vmatpush1.msra.mxu0 %v178
    %182 = vmatprep.subr.mxu0 0.0
    %183 = vmatpush1.msra.mxu0 0.0
    %184 = vmatprep.subr.mxu0 0.0
    %185 = vmatpush1.msra.mxu0 0.0
    %186 = vmatprep.subr.mxu0 0.0
    %187 = vmatpush1.msra.mxu0 0.0
    %188 = vmatprep.subr.mxu0 0.0
    %189 = vmatpush1.msra.mxu0 0.0
    %190 = vmatprep.subr.mxu0 0.0
    %191 = vmatpush1.msra.mxu0 0.0
    %192 = vmatprep.subr.mxu0 0.0
    %193 = vmatpush1.msra.mxu0 0.0
    %194 = vmatprep.subr.mxu0 0.0
    %195 = vmatpush1.msra.mxu0 0.0
    %196 = vmatprep.subr.mxu0 0.0
    %197 = vmatpush1.msra.mxu0 0.0
    %198 = vmatprep.subr.mxu0 0.0
    %199 = vmatpush1.msra.mxu0 0.0
    %200 = vmatprep.subr.mxu0 0.0
    %201 = vmatpush1.msra.mxu0 0.0
    %202 = vmatprep.subr.mxu0 0.0
    %203 = vmatpush1.msra.mxu0 0.0
    %204 = vmatprep.subr.mxu0 0.0
    %205 = vmatpush1.msra.mxu0 0.0
    %206 = vmatprep.subr.mxu0 0.0
    %207 = vmatpush1.msra.mxu0 0.0
    %208 = vmatprep.subr.mxu0 0.0
    %209 = vmatpush1.msra.mxu0 0.0
    %210 = vmatprep.subr.mxu0 0.0
    %211 = vmatpush1.msra.mxu0 0.0
    %212 = vmatprep.subr.mxu0 0.0
    %213 = vmatpush1.msra.mxu0 0.0
    %214 = vmatprep.subr.mxu0 0.0
    %215 = vmatpush1.msra.mxu0 0.0
    %216 = vmatprep.subr.mxu0 0.0
    %217 = vmatpush1.msra.mxu0 0.0
    %218 = vmatprep.subr.mxu0 0.0
    %219 = vmatpush1.msra.mxu0 0.0
    %220 = vmatprep.subr.mxu0 0.0
    %221 = vmatpush1.msra.mxu0 0.0
    %222 = vmatprep.subr.mxu0 0.0
    %223 = vmatpush1.msra.mxu0 0.0
    %224 = vmatprep.subr.mxu0 0.0
    %225 = vmatpush1.msra.mxu0 0.0
    %226 = vmatprep.subr.mxu0 0.0
    %227 = vmatpush1.msra.mxu0 0.0
    %228 = vmatprep.subr.mxu0 0.0
    %229 = vmatpush1.msra.mxu0 0.0
    %230 = vmatprep.subr.mxu0 0.0
    %231 = vmatpush1.msra.mxu0 0.0
    %232 = vmatprep.subr.mxu0 0.0
    %233 = vmatpush1.msra.mxu0 0.0
    %234 = vmatprep.subr.mxu0 0.0
    %235 = vmatpush1.msra.mxu0 0.0
    %236 = vmatprep.subr.mxu0 0.0
    %237 = vmatpush1.msra.mxu0 0.0
    %238 = vmatprep.subr.mxu0 0.0
    %239 = vmatpush1.msra.mxu0 0.0
    %240 = vmatprep.subr.mxu0 0.0
    %241 = vmatpush1.msra.mxu0 0.0
    %242 = vmatprep.subr.mxu0 0.0
    %243 = vmatpush1.msra.mxu0 0.0
    %244 = vmatprep.mubr.f32.mxu0 0.0
    %245 = vmatmul.mubr.f32.gmra.mrb[0].mxu0 %v171
    %v246 = vpop.f32.mrb[0].mxu0
    %v247 = vadd.f32 %v162, %v246
    %v248 = vpop.f32.mrb[0].mxu0
    %249 = vmatprep.mubr.f32.mxu0 0.0
    %250 = vmatmul.mubr.f32.gmra.mrb[0].mxu0 %v174
    %v251 = vpop.f32.mrb[0].mxu0
    %v252 = vadd.f32 %v167, %v251
    %v253 = vpop.f32.mrb[0].mxu0
    %254 = vdwg.mxu0
    %vm255 = vcmask 261120
    %v256 = vsel %vm255, %v247, 0.0
    %257 = vadd.xlane.f32.xlu0 %v256
    %v258 = vpop.xlane.xlu0 %257
    %v259 = vsel %vm255, %v252, 0.0
    %260 = vadd.xlane.f32.xlu0 %v259
    %v261 = vpop.xlane.xlu0 %260
    %v262 = vrcp.pop 32.0
    %v263 = vmul.f32 %v258, %v262
    %v264 = vmul.f32 %v261, %v262
    %v265 = vsub.f32 %v247, %v263
    %v266 = vsub.f32 %v252, %v264
    %v267 = vmul.f32 %v265, %v265
    %v268 = vmul.f32 %v266, %v266
    %v269 = vsel %vm255, %v267, 0.0
    %270 = vadd.xlane.f32.xlu0 %v269
    %v271 = vpop.xlane.xlu0 %270
    %v272 = vsel %vm255, %v268, 0.0
    %273 = vadd.xlane.f32.xlu0 %v272
    %v274 = vpop.xlane.xlu0 %273
    %v275 = vmul.f32 %v271, %v262
    %v276 = vmul.f32 %v274, %v262
    %v277 = vadd.f32 %v275, 1e-05
    %v278 = vadd.f32 %v276, 1e-05
    %v279 = vrsqrt.pop %v277
    %v280 = vrsqrt.pop %v278
    %v281 = vmul.f32 %v265, %v279
    %v282 = vmul.f32 %v266, %v280
    %v283 = vadd.f32 %v281, 3.0
    %v284 = vadd.f32 %v282, 3.0
    %v285 = vmax.f32 %v283, 0.0
    %v286 = vmax.f32 %v284, 0.0
    %v287 = vmin.f32 %v285, 6.0
    %v288 = vmin.f32 %v286, 6.0
    %v289 = vmul.f32 %v287, 0.16666667
    %v290 = vmul.f32 %v288, 0.16666667
    %v291 = vmul.f32 %v281, %v289
    %v292 = vmul.f32 %v282, %v290
    %294 = vset.pattern.permute.xlu0 0
    %295 = vperm.xlu0 %294, %v156
    %v296 = vpop.permute.xlu0 %295
    %vm298 = vcmask 130048
    %v300 = vsel %vm298, %v155, 0
    %302 = vmatprep.subr.mxu0 0.0
    %303 = vmatpush1.msra.mxu0 %v291
    %304 = vmatprep.subr.mxu0 0.0
    %305 = vmatpush1.msra.mxu0 %v292
    %306 = vmatprep.subr.mxu0 0.0
    %307 = vmatpush1.msra.mxu0 0.0
    %308 = vmatprep.subr.mxu0 0.0
    %309 = vmatpush1.msra.mxu0 0.0
    %310 = vmatprep.subr.mxu0 0.0
    %311 = vmatpush1.msra.mxu0 0.0
    %312 = vmatprep.subr.mxu0 0.0
    %313 = vmatpush1.msra.mxu0 0.0
    %314 = vmatprep.subr.mxu0 0.0
    %315 = vmatpush1.msra.mxu0 0.0
    %316 = vmatprep.subr.mxu0 0.0
    %317 = vmatpush1.msra.mxu0 0.0
    %318 = vmatprep.subr.mxu0 0.0
    %319 = vmatpush1.msra.mxu0 0.0
    %320 = vmatprep.subr.mxu0 0.0
    %321 = vmatpush1.msra.mxu0 0.0
    %322 = vmatprep.subr.mxu0 0.0
    %323 = vmatpush1.msra.mxu0 0.0
    %324 = vmatprep.subr.mxu0 0.0
    %325 = vmatpush1.msra.mxu0 0.0
    %326 = vmatprep.subr.mxu0 0.0
    %327 = vmatpush1.msra.mxu0 0.0
    %328 = vmatprep.subr.mxu0 0.0
    %329 = vmatpush1.msra.mxu0 0.0
    %330 = vmatprep.subr.mxu0 0.0
    %331 = vmatpush1.msra.mxu0 0.0
    %332 = vmatprep.subr.mxu0 0.0
    %333 = vmatpush1.msra.mxu0 0.0
    %334 = vmatprep.subr.mxu0 0.0
    %335 = vmatpush1.msra.mxu0 0.0
    %336 = vmatprep.subr.mxu0 0.0
    %337 = vmatpush1.msra.mxu0 0.0
    %338 = vmatprep.subr.mxu0 0.0
    %339 = vmatpush1.msra.mxu0 0.0
    %340 = vmatprep.subr.mxu0 0.0
    %341 = vmatpush1.msra.mxu0 0.0
    %342 = vmatprep.subr.mxu0 0.0
    %343 = vmatpush1.msra.mxu0 0.0
    %344 = vmatprep.subr.mxu0 0.0
    %345 = vmatpush1.msra.mxu0 0.0
    %346 = vmatprep.subr.mxu0 0.0
    %347 = vmatpush1.msra.mxu0 0.0
    %348 = vmatprep.subr.mxu0 0.0
    %349 = vmatpush1.msra.mxu0 0.0
    %350 = vmatprep.subr.mxu0 0.0
    %351 = vmatpush1.msra.mxu0 0.0
    %352 = vmatprep.subr.mxu0 0.0
    %353 = vmatpush1.msra.mxu0 0.0
    %354 = vmatprep.subr.mxu0 0.0
    %355 = vmatpush1.msra.mxu0 0.0
    %356 = vmatprep.subr.mxu0 0.0
    %357 = vmatpush1.msra.mxu0 0.0
    %358 = vmatprep.subr.mxu0 0.0
    %359 = vmatpush1.msra.mxu0 0.0
    %360 = vmatprep.subr.mxu0 0.0
    %361 = vmatpush1.msra.mxu0 0.0
    %362 = vmatprep.subr.mxu0 0.0
    %363 = vmatpush1.msra.mxu0 0.0
    %364 = vmatprep.subr.mxu0 0.0
    %365 = vmatpush1.msra.mxu0 0.0
    %366 = vmatprep.mubr.f32.mxu0 0.0
    %367 = vmatmul.mubr.f32.gmra.mrb[0].mxu0 %v300
    %v368 = vpop.f32.mrb[0].mxu0
    %v369 = vadd.f32 %v296, %v368
    %v370 = vpop.f32.mrb[0].mxu0
    %371 = vdwg.mxu0
    %v372 = vxor.u32 %v369, 2147483648
    %v373 = vmul.f32 %v372, 1.442695
    %v374 = vpow.pop %v373
    %v375 = vadd.f32 %v374, 1.0
    %v376 = vrcp.pop %v375
    %v377 = vmul.f32 1.0, %v376
    %379 = vset.pattern.permute.xlu0 0
    %380 = vperm.xlu0 %379, %v158
    %v381 = vpop.permute.xlu0 %380
    %385 = vrot.lane.b32.xlu0 %v291, 112
    %v386 = vpop.permute.xlu0 %385
    %387 = vrot.lane.b32.xlu0 %v292, 112
    %v388 = vpop.permute.xlu0 %387
    %v392 = vsel %vm298, %v157, 0
    %394 = vmatprep.subr.mxu0 0.0
    %395 = vmatpush1.msra.mxu0 %v386
    %396 = vmatprep.subr.mxu0 0.0
    %397 = vmatpush1.msra.mxu0 %v388
    %398 = vmatprep.subr.mxu0 0.0
    %399 = vmatpush1.msra.mxu0 0.0
    %400 = vmatprep.subr.mxu0 0.0
    %401 = vmatpush1.msra.mxu0 0.0
    %402 = vmatprep.subr.mxu0 0.0
    %403 = vmatpush1.msra.mxu0 0.0
    %404 = vmatprep.subr.mxu0 0.0
    %405 = vmatpush1.msra.mxu0 0.0
    %406 = vmatprep.subr.mxu0 0.0
    %407 = vmatpush1.msra.mxu0 0.0
    %408 = vmatprep.subr.mxu0 0.0
    %409 = vmatpush1.msra.mxu0 0.0
    %410 = vmatprep.subr.mxu0 0.0
    %411 = vmatpush1.msra.mxu0 0.0
    %412 = vmatprep.subr.mxu0 0.0
    %413 = vmatpush1.msra.mxu0 0.0
    %414 = vmatprep.subr.mxu0 0.0
    %415 = vmatpush1.msra.mxu0 0.0
    %416 = vmatprep.subr.mxu0 0.0
    %417 = vmatpush1.msra.mxu0 0.0
    %418 = vmatprep.subr.mxu0 0.0
    %419 = vmatpush1.msra.mxu0 0.0
    %420 = vmatprep.subr.mxu0 0.0
    %421 = vmatpush1.msra.mxu0 0.0
    %422 = vmatprep.subr.mxu0 0.0
    %423 = vmatpush1.msra.mxu0 0.0
    %424 = vmatprep.subr.mxu0 0.0
    %425 = vmatpush1.msra.mxu0 0.0
    %426 = vmatprep.subr.mxu0 0.0
    %427 = vmatpush1.msra.mxu0 0.0
    %428 = vmatprep.subr.mxu0 0.0
    %429 = vmatpush1.msra.mxu0 0.0
    %430 = vmatprep.subr.mxu0 0.0
    %431 = vmatpush1.msra.mxu0 0.0
    %432 = vmatprep.subr.mxu0 0.0
    %433 = vmatpush1.msra.mxu0 0.0
    %434 = vmatprep.subr.mxu0 0.0
    %435 = vmatpush1.msra.mxu0 0.0
    %436 = vmatprep.subr.mxu0 0.0
    %437 = vmatpush1.msra.mxu0 0.0
    %438 = vmatprep.subr.mxu0 0.0
    %439 = vmatpush1.msra.mxu0 0.0
    %440 = vmatprep.subr.mxu0 0.0
    %441 = vmatpush1.msra.mxu0 0.0
    %442 = vmatprep.subr.mxu0 0.0
    %443 = vmatpush1.msra.mxu0 0.0
    %444 = vmatprep.subr.mxu0 0.0
    %445 = vmatpush1.msra.mxu0 0.0
    %446 = vmatprep.subr.mxu0 0.0
    %447 = vmatpush1.msra.mxu0 0.0
    %448 = vmatprep.subr.mxu0 0.0
    %449 = vmatpush1.msra.mxu0 0.0
    %450 = vmatprep.subr.mxu0 0.0
    %451 = vmatpush1.msra.mxu0 0.0
    %452 = vmatprep.subr.mxu0 0.0
    %453 = vmatpush1.msra.mxu0 0.0
    %454 = vmatprep.subr.mxu0 0.0
    %455 = vmatpush1.msra.mxu0 0.0
    %456 = vmatprep.subr.mxu0 0.0
    %457 = vmatpush1.msra.mxu0 0.0
    %458 = vmatprep.mubr.f32.mxu0 0.0
    %459 = vmatmul.mubr.f32.gmra.mrb[0].mxu0 %v392
    %v460 = vpop.f32.mrb[0].mxu0
    %v461 = vadd.f32 %v381, %v460
    %v462 = vpop.f32.mrb[0].mxu0
    %463 = vdwg.mxu0
    %v464 = vxor.u32 %v461, 2147483648
    %v465 = vmul.f32 %v464, 1.442695
    %v466 = vpow.pop %v465
    %v467 = vadd.f32 %v466, 1.0
    %v468 = vrcp.pop %v467
    %v469 = vmul.f32 1.0, %v468
    %vm470 = vcmask 125952
    %471 = vst.msk [vmem:[#allocation2] sm:$0xf] %vm470, %v377
    %472 = vst.msk [vmem:[#allocation3] sm:$0xf] %vm470, %v469
    %v473 = vrot.slane %v150, 4
    %v474 = vsel %vm176, %v473, 0
    %476 = vmatprep.subr.mxu0 0.0
    %477 = vmatpush1.msra.mxu0 %v474
    %478 = vmatprep.subr.mxu0 0.0
    %479 = vmatpush1.msra.mxu0 0.0
    %480 = vmatprep.subr.mxu0 0.0
    %481 = vmatpush1.msra.mxu0 0.0
    %482 = vmatprep.subr.mxu0 0.0
    %483 = vmatpush1.msra.mxu0 0.0
    %484 = vmatprep.subr.mxu0 0.0
    %485 = vmatpush1.msra.mxu0 0.0
    %486 = vmatprep.subr.mxu0 0.0
    %487 = vmatpush1.msra.mxu0 0.0
    %488 = vmatprep.subr.mxu0 0.0
    %489 = vmatpush1.msra.mxu0 0.0
    %490 = vmatprep.subr.mxu0 0.0
    %491 = vmatpush1.msra.mxu0 0.0
    %492 = vmatprep.subr.mxu0 0.0
    %493 = vmatpush1.msra.mxu0 0.0
    %494 = vmatprep.subr.mxu0 0.0
    %495 = vmatpush1.msra.mxu0 0.0
    %496 = vmatprep.subr.mxu0 0.0
    %497 = vmatpush1.msra.mxu0 0.0
    %498 = vmatprep.subr.mxu0 0.0
    %499 = vmatpush1.msra.mxu0 0.0
    %500 = vmatprep.subr.mxu0 0.0
    %501 = vmatpush1.msra.mxu0 0.0
    %502 = vmatprep.subr.mxu0 0.0
    %503 = vmatpush1.msra.mxu0 0.0
    %504 = vmatprep.subr.mxu0 0.0
    %505 = vmatpush1.msra.mxu0 0.0
    %506 = vmatprep.subr.mxu0 0.0
    %507 = vmatpush1.msra.mxu0 0.0
    %508 = vmatprep.subr.mxu0 0.0
    %509 = vmatpush1.msra.mxu0 0.0
    %510 = vmatprep.subr.mxu0 0.0
    %511 = vmatpush1.msra.mxu0 0.0
    %512 = vmatprep.subr.mxu0 0.0
    %513 = vmatpush1.msra.mxu0 0.0
    %514 = vmatprep.subr.mxu0 0.0
    %515 = vmatpush1.msra.mxu0 0.0
    %516 = vmatprep.subr.mxu0 0.0
    %517 = vmatpush1.msra.mxu0 0.0
    %518 = vmatprep.subr.mxu0 0.0
    %519 = vmatpush1.msra.mxu0 0.0
    %520 = vmatprep.subr.mxu0 0.0
    %521 = vmatpush1.msra.mxu0 0.0
    %522 = vmatprep.subr.mxu0 0.0
    %523 = vmatpush1.msra.mxu0 0.0
    %524 = vmatprep.subr.mxu0 0.0
    %525 = vmatpush1.msra.mxu0 0.0
    %526 = vmatprep.subr.mxu0 0.0
    %527 = vmatpush1.msra.mxu0 0.0
    %528 = vmatprep.subr.mxu0 0.0
    %529 = vmatpush1.msra.mxu0 0.0
    %530 = vmatprep.subr.mxu0 0.0
    %531 = vmatpush1.msra.mxu0 0.0
    %532 = vmatprep.subr.mxu0 0.0
    %533 = vmatpush1.msra.mxu0 0.0
    %534 = vmatprep.subr.mxu0 0.0
    %535 = vmatpush1.msra.mxu0 0.0
    %536 = vmatprep.subr.mxu0 0.0
    %537 = vmatpush1.msra.mxu0 0.0
    %538 = vmatprep.subr.mxu0 0.0
    %539 = vmatpush1.msra.mxu0 0.0
    %540 = vmatprep.mubr.f32.mxu0 0.0
    %541 = vmatmul.mubr.f32.gmra.mrb[0].mxu0 %v171
    %v542 = vpop.f32.mrb[0].mxu0
    %v543 = vadd.f32 %v162, %v542
    %v544 = vpop.f32.mrb[0].mxu0
    %545 = vmatprep.mubr.f32.mxu0 0.0
    %546 = vmatmul.mubr.f32.gmra.mrb[0].mxu0 %v174
    %v547 = vpop.f32.mrb[0].mxu0
    %v548 = vadd.f32 %v167, %v547
    %v549 = vpop.f32.mrb[0].mxu0
    %550 = vdwg.mxu0
    %v551 = vsel %vm255, %v543, 0.0
    %552 = vadd.xlane.f32.xlu0 %v551
    %v553 = vpop.xlane.xlu0 %552
    %v554 = vsel %vm255, %v548, 0.0
    %555 = vadd.xlane.f32.xlu0 %v554
    %v556 = vpop.xlane.xlu0 %555
    %v557 = vmul.f32 %v553, %v262
    %v558 = vmul.f32 %v556, %v262
    %v559 = vsub.f32 %v543, %v557
    %v560 = vsub.f32 %v548, %v558
    %v561 = vmul.f32 %v559, %v559
    %v562 = vmul.f32 %v560, %v560
    %v563 = vsel %vm255, %v561, 0.0
    %564 = vadd.xlane.f32.xlu0 %v563
    %v565 = vpop.xlane.xlu0 %564
    %v566 = vsel %vm255, %v562, 0.0
    %567 = vadd.xlane.f32.xlu0 %v566
    %v568 = vpop.xlane.xlu0 %567
    %v569 = vmul.f32 %v565, %v262
    %v570 = vmul.f32 %v568, %v262
    %v571 = vadd.f32 %v569, 1e-05
    %v572 = vadd.f32 %v570, 1e-05
    %v573 = vrsqrt.pop %v571
    %v574 = vrsqrt.pop %v572
    %v575 = vmul.f32 %v559, %v573
    %v576 = vmul.f32 %v560, %v574
    %v577 = vadd.f32 %v575, 3.0
    %v578 = vadd.f32 %v576, 3.0
    %v579 = vmax.f32 %v577, 0.0
    %v580 = vmax.f32 %v578, 0.0
    %v581 = vmin.f32 %v579, 6.0
    %v582 = vmin.f32 %v580, 6.0
    %v583 = vmul.f32 %v581, 0.16666667
    %v584 = vmul.f32 %v582, 0.16666667
    %v585 = vmul.f32 %v575, %v583
    %v586 = vmul.f32 %v576, %v584
    %587 = vmatprep.subr.mxu0 0.0
    %588 = vmatpush1.msra.mxu0 %v585
    %589 = vmatprep.subr.mxu0 0.0
    %590 = vmatpush1.msra.mxu0 %v586
    %591 = vmatprep.subr.mxu0 0.0
    %592 = vmatpush1.msra.mxu0 0.0
    %593 = vmatprep.subr.mxu0 0.0
    %594 = vmatpush1.msra.mxu0 0.0
    %595 = vmatprep.subr.mxu0 0.0
    %596 = vmatpush1.msra.mxu0 0.0
    %597 = vmatprep.subr.mxu0 0.0
    %598 = vmatpush1.msra.mxu0 0.0
    %599 = vmatprep.subr.mxu0 0.0
    %600 = vmatpush1.msra.mxu0 0.0
    %601 = vmatprep.subr.mxu0 0.0
    %602 = vmatpush1.msra.mxu0 0.0
    %603 = vmatprep.subr.mxu0 0.0
    %604 = vmatpush1.msra.mxu0 0.0
    %605 = vmatprep.subr.mxu0 0.0
    %606 = vmatpush1.msra.mxu0 0.0
    %607 = vmatprep.subr.mxu0 0.0
    %608 = vmatpush1.msra.mxu0 0.0
    %609 = vmatprep.subr.mxu0 0.0
    %610 = vmatpush1.msra.mxu0 0.0
    %611 = vmatprep.subr.mxu0 0.0
    %612 = vmatpush1.msra.mxu0 0.0
    %613 = vmatprep.subr.mxu0 0.0
    %614 = vmatpush1.msra.mxu0 0.0
    %615 = vmatprep.subr.mxu0 0.0
    %616 = vmatpush1.msra.mxu0 0.0
    %617 = vmatprep.subr.mxu0 0.0
    %618 = vmatpush1.msra.mxu0 0.0
    %619 = vmatprep.subr.mxu0 0.0
    %620 = vmatpush1.msra.mxu0 0.0
    %621 = vmatprep.subr.mxu0 0.0
    %622 = vmatpush1.msra.mxu0 0.0
    %623 = vmatprep.subr.mxu0 0.0
    %624 = vmatpush1.msra.mxu0 0.0
    %625 = vmatprep.subr.mxu0 0.0
    %626 = vmatpush1.msra.mxu0 0.0
    %627 = vmatprep.subr.mxu0 0.0
    %628 = vmatpush1.msra.mxu0 0.0
    %629 = vmatprep.subr.mxu0 0.0
    %630 = vmatpush1.msra.mxu0 0.0
    %631 = vmatprep.subr.mxu0 0.0
    %632 = vmatpush1.msra.mxu0 0.0
    %633 = vmatprep.subr.mxu0 0.0
    %634 = vmatpush1.msra.mxu0 0.0
    %635 = vmatprep.subr.mxu0 0.0
    %636 = vmatpush1.msra.mxu0 0.0
    %637 = vmatprep.subr.mxu0 0.0
    %638 = vmatpush1.msra.mxu0 0.0
    %639 = vmatprep.subr.mxu0 0.0
    %640 = vmatpush1.msra.mxu0 0.0
    %641 = vmatprep.subr.mxu0 0.0
    %642 = vmatpush1.msra.mxu0 0.0
    %643 = vmatprep.subr.mxu0 0.0
    %644 = vmatpush1.msra.mxu0 0.0
    %645 = vmatprep.subr.mxu0 0.0
    %646 = vmatpush1.msra.mxu0 0.0
    %647 = vmatprep.subr.mxu0 0.0
    %648 = vmatpush1.msra.mxu0 0.0
    %649 = vmatprep.subr.mxu0 0.0
    %650 = vmatpush1.msra.mxu0 0.0
    %651 = vmatprep.mubr.f32.mxu0 0.0
    %652 = vmatmul.mubr.f32.gmra.mrb[0].mxu0 %v300
    %v653 = vpop.f32.mrb[0].mxu0
    %v654 = vadd.f32 %v296, %v653
    %v655 = vpop.f32.mrb[0].mxu0
    %656 = vdwg.mxu0
    %v657 = vxor.u32 %v654, 2147483648
    %v658 = vmul.f32 %v657, 1.442695
    %v659 = vpow.pop %v658
    %v660 = vadd.f32 %v659, 1.0
    %v661 = vrcp.pop %v660
    %v662 = vmul.f32 1.0, %v661
    %665 = vrot.lane.b32.xlu0 %v585, 112
    %v666 = vpop.permute.xlu0 %665
    %667 = vrot.lane.b32.xlu0 %v586, 112
    %v668 = vpop.permute.xlu0 %667
    %671 = vmatprep.subr.mxu0 0.0
    %672 = vmatpush1.msra.mxu0 %v666
    %673 = vmatprep.subr.mxu0 0.0
    %674 = vmatpush1.msra.mxu0 %v668
    %675 = vmatprep.subr.mxu0 0.0
    %676 = vmatpush1.msra.mxu0 0.0
    %677 = vmatprep.subr.mxu0 0.0
    %678 = vmatpush1.msra.mxu0 0.0
    %679 = vmatprep.subr.mxu0 0.0
    %680 = vmatpush1.msra.mxu0 0.0
    %681 = vmatprep.subr.mxu0 0.0
    %682 = vmatpush1.msra.mxu0 0.0
    %683 = vmatprep.subr.mxu0 0.0
    %684 = vmatpush1.msra.mxu0 0.0
    %685 = vmatprep.subr.mxu0 0.0
    %686 = vmatpush1.msra.mxu0 0.0
    %687 = vmatprep.subr.mxu0 0.0
    %688 = vmatpush1.msra.mxu0 0.0
    %689 = vmatprep.subr.mxu0 0.0
    %690 = vmatpush1.msra.mxu0 0.0
    %691 = vmatprep.subr.mxu0 0.0
    %692 = vmatpush1.msra.mxu0 0.0
    %693 = vmatprep.subr.mxu0 0.0
    %694 = vmatpush1.msra.mxu0 0.0
    %695 = vmatprep.subr.mxu0 0.0
    %696 = vmatpush1.msra.mxu0 0.0
    %697 = vmatprep.subr.mxu0 0.0
    %698 = vmatpush1.msra.mxu0 0.0
    %699 = vmatprep.subr.mxu0 0.0
    %700 = vmatpush1.msra.mxu0 0.0
    %701 = vmatprep.subr.mxu0 0.0
    %702 = vmatpush1.msra.mxu0 0.0
    %703 = vmatprep.subr.mxu0 0.0
    %704 = vmatpush1.msra.mxu0 0.0
    %705 = vmatprep.subr.mxu0 0.0
    %706 = vmatpush1.msra.mxu0 0.0
    %707 = vmatprep.subr.mxu0 0.0
    %708 = vmatpush1.msra.mxu0 0.0
    %709 = vmatprep.subr.mxu0 0.0
    %710 = vmatpush1.msra.mxu0 0.0
    %711 = vmatprep.subr.mxu0 0.0
    %712 = vmatpush1.msra.mxu0 0.0
    %713 = vmatprep.subr.mxu0 0.0
    %714 = vmatpush1.msra.mxu0 0.0
    %715 = vmatprep.subr.mxu0 0.0
    %716 = vmatpush1.msra.mxu0 0.0
    %717 = vmatprep.subr.mxu0 0.0
    %718 = vmatpush1.msra.mxu0 0.0
    %719 = vmatprep.subr.mxu0 0.0
    %720 = vmatpush1.msra.mxu0 0.0
    %721 = vmatprep.subr.mxu0 0.0
    %722 = vmatpush1.msra.mxu0 0.0
    %723 = vmatprep.subr.mxu0 0.0
    %724 = vmatpush1.msra.mxu0 0.0
    %725 = vmatprep.subr.mxu0 0.0
    %726 = vmatpush1.msra.mxu0 0.0
    %727 = vmatprep.subr.mxu0 0.0
    %728 = vmatpush1.msra.mxu0 0.0
    %729 = vmatprep.subr.mxu0 0.0
    %730 = vmatpush1.msra.mxu0 0.0
    %731 = vmatprep.subr.mxu0 0.0
    %732 = vmatpush1.msra.mxu0 0.0
    %733 = vmatprep.subr.mxu0 0.0
    %734 = vmatpush1.msra.mxu0 0.0
    %735 = vmatprep.mubr.f32.mxu0 0.0
    %736 = vmatmul.mubr.f32.gmra.mrb[0].mxu0 %v392
    %v737 = vpop.f32.mrb[0].mxu0
    %v738 = vadd.f32 %v381, %v737
    %v739 = vpop.f32.mrb[0].mxu0
    %740 = vdwg.mxu0
    %v741 = vxor.u32 %v738, 2147483648
    %v742 = vmul.f32 %v741, 1.442695
    %v743 = vpow.pop %v742
    %v744 = vadd.f32 %v743, 1.0
    %v745 = vrcp.pop %v744
    %v746 = vmul.f32 1.0, %v745
    %747 = vst.msk [vmem:[#allocation2 + $0x4] sm:$0xf] %vm470, %v662
    %748 = vst.msk [vmem:[#allocation3 + $0x4] sm:$0xf] %vm470, %v746
    %v749 = vld [vmem:[#allocation2] sm:$0xff]
    %v750 = vld [vmem:[%s9] sm:$0xff]
    %v751 = vld [vmem:[%s9 + $0x8] sm:$0xff]
    %v752 = vld [vmem:[%s9 + $0x10] sm:$0xff]
    %v753 = vld [vmem:[%s9 + $0x18] sm:$0xff]
    %v755 = vsel %vm298, %v749, 0
    %757 = vmatprep.subr.mxu0 %v751
    %758 = vmatpush1.msra.mxu0 %v750
    %759 = vmatprep.subr.mxu0 %v753
    %760 = vmatpush1.msra.mxu0 %v752
    %761 = vmatprep.subr.mxu0 0.0
    %762 = vmatpush1.msra.mxu0 0.0
    %763 = vmatprep.subr.mxu0 0.0
    %764 = vmatpush1.msra.mxu0 0.0
    %765 = vmatprep.subr.mxu0 0.0
    %766 = vmatpush1.msra.mxu0 0.0
    %767 = vmatprep.subr.mxu0 0.0
    %768 = vmatpush1.msra.mxu0 0.0
    %769 = vmatprep.subr.mxu0 0.0
    %770 = vmatpush1.msra.mxu0 0.0
    %771 = vmatprep.subr.mxu0 0.0
    %772 = vmatpush1.msra.mxu0 0.0
    %773 = vmatprep.subr.mxu0 0.0
    %774 = vmatpush1.msra.mxu0 0.0
    %775 = vmatprep.subr.mxu0 0.0
    %776 = vmatpush1.msra.mxu0 0.0
    %777 = vmatprep.subr.mxu0 0.0
    %778 = vmatpush1.msra.mxu0 0.0
    %779 = vmatprep.subr.mxu0 0.0
    %780 = vmatpush1.msra.mxu0 0.0
    %781 = vmatprep.subr.mxu0 0.0
    %782 = vmatpush1.msra.mxu0 0.0
    %783 = vmatprep.subr.mxu0 0.0
    %784 = vmatpush1.msra.mxu0 0.0
    %785 = vmatprep.subr.mxu0 0.0
    %786 = vmatpush1.msra.mxu0 0.0
    %787 = vmatprep.subr.mxu0 0.0
    %788 = vmatpush1.msra.mxu0 0.0
    %789 = vmatprep.subr.mxu0 0.0
    %790 = vmatpush1.msra.mxu0 0.0
    %791 = vmatprep.subr.mxu0 0.0
    %792 = vmatpush1.msra.mxu0 0.0
    %793 = vmatprep.subr.mxu0 0.0
    %794 = vmatpush1.msra.mxu0 0.0
    %795 = vmatprep.subr.mxu0 0.0
    %796 = vmatpush1.msra.mxu0 0.0
    %797 = vmatprep.subr.mxu0 0.0
    %798 = vmatpush1.msra.mxu0 0.0
    %799 = vmatprep.subr.mxu0 0.0
    %800 = vmatpush1.msra.mxu0 0.0
    %801 = vmatprep.subr.mxu0 0.0
    %802 = vmatpush1.msra.mxu0 0.0
    %803 = vmatprep.subr.mxu0 0.0
    %804 = vmatpush1.msra.mxu0 0.0
    %805 = vmatprep.subr.mxu0 0.0
    %806 = vmatpush1.msra.mxu0 0.0
    %807 = vmatprep.subr.mxu0 0.0
    %808 = vmatpush1.msra.mxu0 0.0
    %809 = vmatprep.subr.mxu0 0.0
    %810 = vmatpush1.msra.mxu0 0.0
    %811 = vmatprep.subr.mxu0 0.0
    %812 = vmatpush1.msra.mxu0 0.0
    %813 = vmatprep.subr.mxu0 0.0
    %814 = vmatpush1.msra.mxu0 0.0
    %815 = vmatprep.subr.mxu0 0.0
    %816 = vmatpush1.msra.mxu0 0.0
    %817 = vmatprep.subr.mxu0 0.0
    %818 = vmatpush1.msra.mxu0 0.0
    %819 = vmatprep.subr.mxu0 0.0
    %820 = vmatpush1.msra.mxu0 0.0
    %821 = vmatprep.mubr.f32.mxu0 0.0
    %822 = vmatmul.mubr.f32.gmra.mrb[0].mxu0 %v755
    %v823 = vpop.f32.mrb[0].mxu0
    %v824 = vadd.f32 0.0, %v823
    %v825 = vpop.f32.mrb[0].mxu0
    %v826 = vadd.f32 0.0, %v825
    %827 = vdwg.mxu0
    %v828 = vld [vmem:[#allocation3] sm:$0xff]
    %v829 = vld [vmem:[%s10] sm:$0xff]
    %v830 = vld [vmem:[%s10 + $0x8] sm:$0xff]
    %v831 = vld [vmem:[%s10 + $0x10] sm:$0xff]
    %v832 = vld [vmem:[%s10 + $0x18] sm:$0xff]
    %v834 = vsel %vm298, %v828, 0
    %836 = vmatprep.subr.mxu0 %v830
    %837 = vmatpush1.msra.mxu0 %v829
    %838 = vmatprep.subr.mxu0 %v832
    %839 = vmatpush1.msra.mxu0 %v831
    %840 = vmatprep.subr.mxu0 0.0
    %841 = vmatpush1.msra.mxu0 0.0
    %842 = vmatprep.subr.mxu0 0.0
    %843 = vmatpush1.msra.mxu0 0.0
    %844 = vmatprep.subr.mxu0 0.0
    %845 = vmatpush1.msra.mxu0 0.0
    %846 = vmatprep.subr.mxu0 0.0
    %847 = vmatpush1.msra.mxu0 0.0
    %848 = vmatprep.subr.mxu0 0.0
    %849 = vmatpush1.msra.mxu0 0.0
    %850 = vmatprep.subr.mxu0 0.0
    %851 = vmatpush1.msra.mxu0 0.0
    %852 = vmatprep.subr.mxu0 0.0
    %853 = vmatpush1.msra.mxu0 0.0
    %854 = vmatprep.subr.mxu0 0.0
    %855 = vmatpush1.msra.mxu0 0.0
    %856 = vmatprep.subr.mxu0 0.0
    %857 = vmatpush1.msra.mxu0 0.0
    %858 = vmatprep.subr.mxu0 0.0
    %859 = vmatpush1.msra.mxu0 0.0
    %860 = vmatprep.subr.mxu0 0.0
    %861 = vmatpush1.msra.mxu0 0.0
    %862 = vmatprep.subr.mxu0 0.0
    %863 = vmatpush1.msra.mxu0 0.0
    %864 = vmatprep.subr.mxu0 0.0
    %865 = vmatpush1.msra.mxu0 0.0
    %866 = vmatprep.subr.mxu0 0.0
    %867 = vmatpush1.msra.mxu0 0.0
    %868 = vmatprep.subr.mxu0 0.0
    %869 = vmatpush1.msra.mxu0 0.0
    %870 = vmatprep.subr.mxu0 0.0
    %871 = vmatpush1.msra.mxu0 0.0
    %872 = vmatprep.subr.mxu0 0.0
    %873 = vmatpush1.msra.mxu0 0.0
    %874 = vmatprep.subr.mxu0 0.0
    %875 = vmatpush1.msra.mxu0 0.0
    %876 = vmatprep.subr.mxu0 0.0
    %877 = vmatpush1.msra.mxu0 0.0
    %878 = vmatprep.subr.mxu0 0.0
    %879 = vmatpush1.msra.mxu0 0.0
    %880 = vmatprep.subr.mxu0 0.0
    %881 = vmatpush1.msra.mxu0 0.0
    %882 = vmatprep.subr.mxu0 0.0
    %883 = vmatpush1.msra.mxu0 0.0
    %884 = vmatprep.subr.mxu0 0.0
    %885 = vmatpush1.msra.mxu0 0.0
    %886 = vmatprep.subr.mxu0 0.0
    %887 = vmatpush1.msra.mxu0 0.0
    %888 = vmatprep.subr.mxu0 0.0
    %889 = vmatpush1.msra.mxu0 0.0
    %890 = vmatprep.subr.mxu0 0.0
    %891 = vmatpush1.msra.mxu0 0.0
    %892 = vmatprep.subr.mxu0 0.0
    %893 = vmatpush1.msra.mxu0 0.0
    %894 = vmatprep.subr.mxu0 0.0
    %895 = vmatpush1.msra.mxu0 0.0
    %896 = vmatprep.subr.mxu0 0.0
    %897 = vmatpush1.msra.mxu0 0.0
    %898 = vmatprep.subr.mxu0 0.0
    %899 = vmatpush1.msra.mxu0 0.0
    %900 = vmatprep.mubr.f32.mxu0 0.0
    %901 = vmatmul.mubr.f32.gmra.mrb[0].mxu0 %v834
    %v902 = vpop.f32.mrb[0].mxu0
    %v903 = vadd.f32 0.0, %v902
    %v904 = vpop.f32.mrb[0].mxu0
    %v905 = vadd.f32 0.0, %v904
    %906 = vdwg.mxu0
    %v907 = vmul.f32 %v824, %v903
    %v908 = vmul.f32 %v826, %v905
    %v909 = vadd.f32 %v907, 1.0
    %v910 = vadd.f32 %v908, 1.0
    %v911 = vld [vmem:[%s0] sm:$0xff]
    %v912 = vld [vmem:[%s0 + $0x8] sm:$0xff]
    %v913 = vmul.f32 %v911, %v909
    %v914 = vmul.f32 %v912, %v910
    %915 = vst [vmem:[#allocation4] sm:$0xff] %v913
    %916 = vst [vmem:[#allocation4 + $0x8] sm:$0xff] %v914
    // Predicated region
    $region46: #{tpu_custom_call.1} parent=1 // pred_check
      _
    $region47: #{tpu_custom_call.1} parent=1 // pred_check_branch
      %918 = sbr.rel (0) target = $region49
    $region48: #{tpu_custom_call.1} parent=1 // pred_region
      %s920 = ssub.s32 256, 256
      %921 = vsyncadd [#allocation5], %s920
      %s923 = sshll.u32 [#allocation4], 4
      %s924 = int_to_ptr.vmem [resolvable:$true] %s923
      %926 = dma.vmem_to_hbm [thread:$0]  %s924, 256, %s11, [#allocation5]
    $region49: #{tpu_custom_call.1} parent=1 // pred_fallthru
      _
    // Predicated region
    $region50: #{tpu_custom_call.1} parent=1 // pred_check
      _
    $region51: #{tpu_custom_call.1} parent=1 // pred_check_branch
      %928 = sbr.rel (0) target = $region53
    $region52: #{tpu_custom_call.1} parent=1 // pred_region
      %929 = dma.done [#allocation5], 256
    $region53: #{tpu_custom_call.1} parent=1 // pred_fallthru
      _
    %930 = vsyncpa [#allocation5], 1

// kernel: tpu_custom_call.1
$region0: #{tpu_custom_call.1}
  #allocation0 [shape = 'u32[]', space=smem, size = 0x4, offset = 0x4, fixed_abs, tag = 'smem constant byte address 0x4 - core index']
  #allocation1 [shape = 'u32[144,128]{1,0:T(1,128)}', space=vmem, size = 0x12000, scoped, tag = 'internal scratch']
  #allocation2 [shape = 'f32[8,16]{1,0:T(8,128)}', space=vmem, size = 0x1000, scoped, tag = 'scratch operand']
  #allocation3 [shape = 'f32[8,16]{1,0:T(8,128)}', space=vmem, size = 0x1000, scoped, tag = 'scratch operand']
  %s0 = inlined_call_operand.vmem [shape: f32[8,256], index: 0, kind: input, shape index: {}]
  %s1 = inlined_call_operand.vmem [shape: f32[16,4], index: 1, kind: input, shape index: {}]
  %s2 = inlined_call_operand.vmem [shape: f32[16,1], index: 2, kind: input, shape index: {}]
  %s3 = inlined_call_operand.vmem [shape: f32[4,16], index: 3, kind: input, shape index: {}]
  %s4 = inlined_call_operand.vmem [shape: f32[4,1], index: 4, kind: input, shape index: {}]
  %s5 = inlined_call_operand.vmem [shape: f32[4,16], index: 5, kind: input, shape index: {}]
  %s6 = inlined_call_operand.vmem [shape: f32[4,1], index: 6, kind: input, shape index: {}]
  %s7 = inlined_call_operand.vmem [shape: f32[256,32], index: 7, kind: input, shape index: {}]
  %s8 = inlined_call_operand.vmem [shape: f32[1,32], index: 8, kind: input, shape index: {}]
  %s9 = inlined_call_operand.vmem [shape: f32[16,256], index: 9, kind: input, shape index: {}]
  %s10 = inlined_call_operand.vmem [shape: f32[16,256], index: 10, kind: input, shape index: {}]
  %s11 = inlined_call_operand.hbm [shape: f32[8,256], index: 11, kind: output, shape index: {}]
  %s12 = sld [smem:[#allocation0]]
  $region54: #{tpu_custom_call.1} parent=0
    _
  %s14 = ssub.s32 1, %s12
  %s15 = scalar_select 0, %s14, %s12
  $region1: #{tpu_custom_call.1} parent=0
    #allocation4 [shape = 'u8[8192]{0}', space=vmem, size = 0x2000, scoped, tag = 'output window, operand 0, single buffered']
    #allocation5 [shape = 's32[1]{0}', space=sflag, size = 0x4, scoped, tag = 'scoped memory for tpu_custom_call.1']
    %16 = vsyncpa [#allocation5], 0
    // Predicated region
    $region2: #{tpu_custom_call.1} parent=1 // pred_check
      _
    $region3: #{tpu_custom_call.1} parent=1 // pred_check_branch
      %18 = sbr.rel (0) target = $region5
    $region4: #{tpu_custom_call.1} parent=1 // pred_region
      _
    $region5: #{tpu_custom_call.1} parent=1 // pred_fallthru
      _
    // Predicated region
    $region6: #{tpu_custom_call.1} parent=1 // pred_check
      _
    $region7: #{tpu_custom_call.1} parent=1 // pred_check_branch
      %20 = sbr.rel (0) target = $region9
    $region8: #{tpu_custom_call.1} parent=1 // pred_region
      _
    $region9: #{tpu_custom_call.1} parent=1 // pred_fallthru
      _
    // Predicated region
    $region10: #{tpu_custom_call.1} parent=1 // pred_check
      _
    $region11: #{tpu_custom_call.1} parent=1 // pred_check_branch
      %22 = sbr.rel (0) target = $region13
    $region12: #{tpu_custom_call.1} parent=1 // pred_region
      _
    $region13: #{tpu_custom_call.1} parent=1 // pred_fallthru
      _
    // Predicated region
    $region14: #{tpu_custom_call.1} parent=1 // pred_check
      _
    $region15: #{tpu_custom_call.1} parent=1 // pred_check_branch
      %24 = sbr.rel (0) target = $region17
    $region16: #{tpu_custom_call.1} parent=1 // pred_region
      _
    $region17: #{tpu_custom_call.1} parent=1 // pred_fallthru
      _
    // Predicated region
    $region18: #{tpu_custom_call.1} parent=1 // pred_check
      _
    $region19: #{tpu_custom_call.1} parent=1 // pred_check_branch
      %26 = sbr.rel (0) target = $region21
    $region20: #{tpu_custom_call.1} parent=1 // pred_region
      _
    $region21: #{tpu_custom_call.1} parent=1 // pred_fallthru
      _
    // Predicated region
    $region22: #{tpu_custom_call.1} parent=1 // pred_check
      _
    $region23: #{tpu_custom_call.1} parent=1 // pred_check_branch
      %28 = sbr.rel (0) target = $region25
    $region24: #{tpu_custom_call.1} parent=1 // pred_region
      _
    $region25: #{tpu_custom_call.1} parent=1 // pred_fallthru
      _
    // Predicated region
    $region26: #{tpu_custom_call.1} parent=1 // pred_check
      _
    $region27: #{tpu_custom_call.1} parent=1 // pred_check_branch
      %30 = sbr.rel (0) target = $region29
    $region28: #{tpu_custom_call.1} parent=1 // pred_region
      _
    $region29: #{tpu_custom_call.1} parent=1 // pred_fallthru
      _
    // Predicated region
    $region30: #{tpu_custom_call.1} parent=1 // pred_check
      _
    $region31: #{tpu_custom_call.1} parent=1 // pred_check_branch
      %32 = sbr.rel (0) target = $region33
    $region32: #{tpu_custom_call.1} parent=1 // pred_region
      _
    $region33: #{tpu_custom_call.1} parent=1 // pred_fallthru
      _
    // Predicated region
    $region34: #{tpu_custom_call.1} parent=1 // pred_check
      _
    $region35: #{tpu_custom_call.1} parent=1 // pred_check_branch
      %34 = sbr.rel (0) target = $region37
    $region36: #{tpu_custom_call.1} parent=1 // pred_region
      _
    $region37: #{tpu_custom_call.1} parent=1 // pred_fallthru
      _
    // Predicated region
    $region38: #{tpu_custom_call.1} parent=1 // pred_check
      _
    $region39: #{tpu_custom_call.1} parent=1 // pred_check_branch
      %36 = sbr.rel (0) target = $region41
    $region40: #{tpu_custom_call.1} parent=1 // pred_region
      _
    $region41: #{tpu_custom_call.1} parent=1 // pred_fallthru
      _
    // Predicated region
    $region42: #{tpu_custom_call.1} parent=1 // pred_check
      _
    $region43: #{tpu_custom_call.1} parent=1 // pred_check_branch
      %38 = sbr.rel (0) target = $region45
    $region44: #{tpu_custom_call.1} parent=1 // pred_region
      _
    $region45: #{tpu_custom_call.1} parent=1 // pred_fallthru
      _
    %v39 = vld [vmem:[%s0] sm:$0xff]
    %v40 = vld [vmem:[%s0 + $0x8] sm:$0xff]
    %v41 = vld [vmem:[%s7] sm:$0xff]
    %v42 = vld [vmem:[%s7 + $0x8] sm:$0xff]
    %v43 = vld [vmem:[%s7 + $0x10] sm:$0xff]
    %v44 = vld [vmem:[%s7 + $0x18] sm:$0xff]
    %v45 = vld [vmem:[%s7 + $0x20] sm:$0xff]
    %v46 = vld [vmem:[%s7 + $0x28] sm:$0xff]
    %v47 = vld [vmem:[%s7 + $0x30] sm:$0xff]
    %v48 = vld [vmem:[%s7 + $0x38] sm:$0xff]
    %v49 = vld [vmem:[%s7 + $0x40] sm:$0xff]
    %v50 = vld [vmem:[%s7 + $0x48] sm:$0xff]
    %v51 = vld [vmem:[%s7 + $0x50] sm:$0xff]
    %v52 = vld [vmem:[%s7 + $0x58] sm:$0xff]
    %v53 = vld [vmem:[%s7 + $0x60] sm:$0xff]
    %v54 = vld [vmem:[%s7 + $0x68] sm:$0xff]
    %v55 = vld [vmem:[%s7 + $0x70] sm:$0xff]
    %v56 = vld [vmem:[%s7 + $0x78] sm:$0xff]
    %v57 = vld [vmem:[%s7 + $0x80] sm:$0xff]
    %v58 = vld [vmem:[%s7 + $0x88] sm:$0xff]
    %v59 = vld [vmem:[%s7 + $0x90] sm:$0xff]
    %v60 = vld [vmem:[%s7 + $0x98] sm:$0xff]
    %v61 = vld [vmem:[%s7 + $0xa0] sm:$0xff]
    %v62 = vld [vmem:[%s7 + $0xa8] sm:$0xff]
    %v63 = vld [vmem:[%s7 + $0xb0] sm:$0xff]
    %v64 = vld [vmem:[%s7 + $0xb8] sm:$0xff]
    %v65 = vld [vmem:[%s7 + $0xc0] sm:$0xff]
    %v66 = vld [vmem:[%s7 + $0xc8] sm:$0xff]
    %v67 = vld [vmem:[%s7 + $0xd0] sm:$0xff]
    %v68 = vld [vmem:[%s7 + $0xd8] sm:$0xff]
    %v69 = vld [vmem:[%s7 + $0xe0] sm:$0xff]
    %v70 = vld [vmem:[%s7 + $0xe8] sm:$0xff]
    %v71 = vld [vmem:[%s7 + $0xf0] sm:$0xff]
    %v72 = vld [vmem:[%s7 + $0xf8] sm:$0xff]
    %73 = vmatprep.subr.mxu0 0.0
    %74 = vmatpush1.msra.mxu0 %v41
    %75 = vmatprep.subr.mxu0 0.0
    %76 = vmatpush1.msra.mxu0 %v42
    %77 = vmatprep.subr.mxu0 0.0
    %78 = vmatpush1.msra.mxu0 %v43
    %79 = vmatprep.subr.mxu0 0.0
    %80 = vmatpush1.msra.mxu0 %v44
    %81 = vmatprep.subr.mxu0 0.0
    %82 = vmatpush1.msra.mxu0 %v45
    %83 = vmatprep.subr.mxu0 0.0
    %84 = vmatpush1.msra.mxu0 %v46
    %85 = vmatprep.subr.mxu0 0.0
    %86 = vmatpush1.msra.mxu0 %v47
    %87 = vmatprep.subr.mxu0 0.0
    %88 = vmatpush1.msra.mxu0 %v48
    %89 = vmatprep.subr.mxu0 0.0
    %90 = vmatpush1.msra.mxu0 %v49
    %91 = vmatprep.subr.mxu0 0.0
    %92 = vmatpush1.msra.mxu0 %v50
    %93 = vmatprep.subr.mxu0 0.0
    %94 = vmatpush1.msra.mxu0 %v51
    %95 = vmatprep.subr.mxu0 0.0
    %96 = vmatpush1.msra.mxu0 %v52
    %97 = vmatprep.subr.mxu0 0.0
    %98 = vmatpush1.msra.mxu0 %v53
    %99 = vmatprep.subr.mxu0 0.0
    %100 = vmatpush1.msra.mxu0 %v54
    %101 = vmatprep.subr.mxu0 0.0
    %102 = vmatpush1.msra.mxu0 %v55
    %103 = vmatprep.subr.mxu0 0.0
    %104 = vmatpush1.msra.mxu0 %v56
    %105 = vmatprep.subr.mxu0 0.0
    %106 = vmatpush1.msra.mxu0 %v57
    %107 = vmatprep.subr.mxu0 0.0
    %108 = vmatpush1.msra.mxu0 %v58
    %109 = vmatprep.subr.mxu0 0.0
    %110 = vmatpush1.msra.mxu0 %v59
    %111 = vmatprep.subr.mxu0 0.0
    %112 = vmatpush1.msra.mxu0 %v60
    %113 = vmatprep.subr.mxu0 0.0
    %114 = vmatpush1.msra.mxu0 %v61
    %115 = vmatprep.subr.mxu0 0.0
    %116 = vmatpush1.msra.mxu0 %v62
    %117 = vmatprep.subr.mxu0 0.0
    %118 = vmatpush1.msra.mxu0 %v63
    %119 = vmatprep.subr.mxu0 0.0
    %120 = vmatpush1.msra.mxu0 %v64
    %121 = vmatprep.subr.mxu0 0.0
    %122 = vmatpush1.msra.mxu0 %v65
    %123 = vmatprep.subr.mxu0 0.0
    %124 = vmatpush1.msra.mxu0 %v66
    %125 = vmatprep.subr.mxu0 0.0
    %126 = vmatpush1.msra.mxu0 %v67
    %127 = vmatprep.subr.mxu0 0.0
    %128 = vmatpush1.msra.mxu0 %v68
    %129 = vmatprep.subr.mxu0 0.0
    %130 = vmatpush1.msra.mxu0 %v69
    %131 = vmatprep.subr.mxu0 0.0
    %132 = vmatpush1.msra.mxu0 %v70
    %133 = vmatprep.subr.mxu0 0.0
    %134 = vmatpush1.msra.mxu0 %v71
    %135 = vmatprep.subr.mxu0 0.0
    %136 = vmatpush1.msra.mxu0 %v72
    %137 = vmatprep.mubr.f32.mxu0 %v40
    %138 = vmatmul.mubr.f32.gmra.mrb[0].mxu0 %v39
    %v139 = vpop.f32.mrb[0].mxu0
    %v140 = vadd.f32 0.0, %v139
    %v141 = vpop.f32.mrb[0].mxu0
    %142 = vdwg.mxu0
    %v143 = vld [vmem:[%s8] sm:$0x1]
    %v145 = vlaneseq
    %v146 = vshrl.u32 %v145, 7
    %v147 = vsub.s32 0, %v146
    %v148 = vrot.slane %v143, %v147
    %v150 = vmul.f32 %v140, %v148
    %v151 = vld [vmem:[%s1] sm:$0xff]
    %v152 = vld [vmem:[%s1 + $0x8] sm:$0xff]
    %v153 = vld [vmem:[%s2] sm:$0xff]
    %v154 = vld [vmem:[%s2 + $0x8] sm:$0xff]
    %v155 = vld [vmem:[%s3] sm:$0xf]
    %v156 = vld [vmem:[%s4] sm:$0xf]
    %v157 = vld [vmem:[%s5] sm:$0xf]
    %v158 = vld [vmem:[%s6] sm:$0xf]
    %160 = vset.pattern.permute.xlu0 0
    %161 = vperm.xlu0 %160, %v153
    %v162 = vpop.permute.xlu0 %161
    %165 = vset.pattern.permute.xlu0 0
    %166 = vperm.xlu0 %165, %v154
    %v167 = vpop.permute.xlu0 %166
    %vm169 = vcmask 31744
    %v171 = vsel %vm169, %v151, 0
    %v174 = vsel %vm169, %v152, 0
    %vm176 = vcmask 1043456
    %v178 = vsel %vm176, %v150, 0
    %180 = vmatprep.subr.mxu0 0.0
    %181 = vmatpush1.msra.mxu0 %v178
    %182 = vmatprep.subr.mxu0 0.0
    %183 = vmatpush1.msra.mxu0 0.0
    %184 = vmatprep.subr.mxu0 0.0
    %185 = vmatpush1.msra.mxu0 0.0
    %186 = vmatprep.subr.mxu0 0.0
    %187 = vmatpush1.msra.mxu0 0.0
    %188 = vmatprep.subr.mxu0 0.0
    %189 = vmatpush1.msra.mxu0 0.0
    %190 = vmatprep.subr.mxu0 0.0
    %191 = vmatpush1.msra.mxu0 0.0
    %192 = vmatprep.subr.mxu0 0.0
    %193 = vmatpush1.msra.mxu0 0.0
    %194 = vmatprep.subr.mxu0 0.0
    %195 = vmatpush1.msra.mxu0 0.0
    %196 = vmatprep.subr.mxu0 0.0
    %197 = vmatpush1.msra.mxu0 0.0
    %198 = vmatprep.subr.mxu0 0.0
    %199 = vmatpush1.msra.mxu0 0.0
    %200 = vmatprep.subr.mxu0 0.0
    %201 = vmatpush1.msra.mxu0 0.0
    %202 = vmatprep.subr.mxu0 0.0
    %203 = vmatpush1.msra.mxu0 0.0
    %204 = vmatprep.subr.mxu0 0.0
    %205 = vmatpush1.msra.mxu0 0.0
    %206 = vmatprep.subr.mxu0 0.0
    %207 = vmatpush1.msra.mxu0 0.0
    %208 = vmatprep.subr.mxu0 0.0
    %209 = vmatpush1.msra.mxu0 0.0
    %210 = vmatprep.subr.mxu0 0.0
    %211 = vmatpush1.msra.mxu0 0.0
    %212 = vmatprep.subr.mxu0 0.0
    %213 = vmatpush1.msra.mxu0 0.0
    %214 = vmatprep.subr.mxu0 0.0
    %215 = vmatpush1.msra.mxu0 0.0
    %216 = vmatprep.subr.mxu0 0.0
    %217 = vmatpush1.msra.mxu0 0.0
    %218 = vmatprep.subr.mxu0 0.0
    %219 = vmatpush1.msra.mxu0 0.0
    %220 = vmatprep.subr.mxu0 0.0
    %221 = vmatpush1.msra.mxu0 0.0
    %222 = vmatprep.subr.mxu0 0.0
    %223 = vmatpush1.msra.mxu0 0.0
    %224 = vmatprep.subr.mxu0 0.0
    %225 = vmatpush1.msra.mxu0 0.0
    %226 = vmatprep.subr.mxu0 0.0
    %227 = vmatpush1.msra.mxu0 0.0
    %228 = vmatprep.subr.mxu0 0.0
    %229 = vmatpush1.msra.mxu0 0.0
    %230 = vmatprep.subr.mxu0 0.0
    %231 = vmatpush1.msra.mxu0 0.0
    %232 = vmatprep.subr.mxu0 0.0
    %233 = vmatpush1.msra.mxu0 0.0
    %234 = vmatprep.subr.mxu0 0.0
    %235 = vmatpush1.msra.mxu0 0.0
    %236 = vmatprep.subr.mxu0 0.0
    %237 = vmatpush1.msra.mxu0 0.0
    %238 = vmatprep.subr.mxu0 0.0
    %239 = vmatpush1.msra.mxu0 0.0
    %240 = vmatprep.subr.mxu0 0.0
    %241 = vmatpush1.msra.mxu0 0.0
    %242 = vmatprep.subr.mxu0 0.0
    %243 = vmatpush1.msra.mxu0 0.0
    %244 = vmatprep.mubr.f32.mxu0 0.0
    %245 = vmatmul.mubr.f32.gmra.mrb[0].mxu0 %v171
    %v246 = vpop.f32.mrb[0].mxu0
    %v247 = vadd.f32 %v162, %v246
    %v248 = vpop.f32.mrb[0].mxu0
    %249 = vmatprep.mubr.f32.mxu0 0.0
    %250 = vmatmul.mubr.f32.gmra.mrb[0].mxu0 %v174
    %v251 = vpop.f32.mrb[0].mxu0
    %v252 = vadd.f32 %v167, %v251
    %v253 = vpop.f32.mrb[0].mxu0
    %254 = vdwg.mxu0
    %vm255 = vcmask 261120
    %v256 = vsel %vm255, %v247, 0.0
    %257 = vadd.xlane.f32.xlu0 %v256
    %v258 = vpop.xlane.xlu0 %257
    %v259 = vsel %vm255, %v252, 0.0
    %260 = vadd.xlane.f32.xlu0 %v259
    %v261 = vpop.xlane.xlu0 %260
    %v262 = vrcp.pop 32.0
    %v263 = vmul.f32 %v258, %v262
    %v264 = vmul.f32 %v261, %v262
    %v265 = vsub.f32 %v247, %v263
    %v266 = vsub.f32 %v252, %v264
    %v267 = vmul.f32 %v265, %v265
    %v268 = vmul.f32 %v266, %v266
    %v269 = vsel %vm255, %v267, 0.0
    %270 = vadd.xlane.f32.xlu0 %v269
    %v271 = vpop.xlane.xlu0 %270
    %v272 = vsel %vm255, %v268, 0.0
    %273 = vadd.xlane.f32.xlu0 %v272
    %v274 = vpop.xlane.xlu0 %273
    %v275 = vmul.f32 %v271, %v262
    %v276 = vmul.f32 %v274, %v262
    %v277 = vadd.f32 %v275, 1e-05
    %v278 = vadd.f32 %v276, 1e-05
    %v279 = vrsqrt.pop %v277
    %v280 = vrsqrt.pop %v278
    %v281 = vmul.f32 %v265, %v279
    %v282 = vmul.f32 %v266, %v280
    %v283 = vadd.f32 %v281, 3.0
    %v284 = vadd.f32 %v282, 3.0
    %v285 = vmax.f32 %v283, 0.0
    %v286 = vmax.f32 %v284, 0.0
    %v287 = vmin.f32 %v285, 6.0
    %v288 = vmin.f32 %v286, 6.0
    %v289 = vmul.f32 %v287, 0.16666667
    %v290 = vmul.f32 %v288, 0.16666667
    %v291 = vmul.f32 %v281, %v289
    %v292 = vmul.f32 %v282, %v290
    %294 = vset.pattern.permute.xlu0 0
    %295 = vperm.xlu0 %294, %v156
    %v296 = vpop.permute.xlu0 %295
    %vm298 = vcmask 130048
    %v300 = vsel %vm298, %v155, 0
    %302 = vmatprep.subr.mxu0 0.0
    %303 = vmatpush1.msra.mxu0 %v291
    %304 = vmatprep.subr.mxu0 0.0
    %305 = vmatpush1.msra.mxu0 %v292
    %306 = vmatprep.subr.mxu0 0.0
    %307 = vmatpush1.msra.mxu0 0.0
    %308 = vmatprep.subr.mxu0 0.0
    %309 = vmatpush1.msra.mxu0 0.0
    %310 = vmatprep.subr.mxu0 0.0
    %311 = vmatpush1.msra.mxu0 0.0
    %312 = vmatprep.subr.mxu0 0.0
    %313 = vmatpush1.msra.mxu0 0.0
    %314 = vmatprep.subr.mxu0 0.0
    %315 = vmatpush1.msra.mxu0 0.0
    %316 = vmatprep.subr.mxu0 0.0
    %317 = vmatpush1.msra.mxu0 0.0
    %318 = vmatprep.subr.mxu0 0.0
    %319 = vmatpush1.msra.mxu0 0.0
    %320 = vmatprep.subr.mxu0 0.0
    %321 = vmatpush1.msra.mxu0 0.0
    %322 = vmatprep.subr.mxu0 0.0
    %323 = vmatpush1.msra.mxu0 0.0
    %324 = vmatprep.subr.mxu0 0.0
    %325 = vmatpush1.msra.mxu0 0.0
    %326 = vmatprep.subr.mxu0 0.0
    %327 = vmatpush1.msra.mxu0 0.0
    %328 = vmatprep.subr.mxu0 0.0
    %329 = vmatpush1.msra.mxu0 0.0
    %330 = vmatprep.subr.mxu0 0.0
    %331 = vmatpush1.msra.mxu0 0.0
    %332 = vmatprep.subr.mxu0 0.0
    %333 = vmatpush1.msra.mxu0 0.0
    %334 = vmatprep.subr.mxu0 0.0
    %335 = vmatpush1.msra.mxu0 0.0
    %336 = vmatprep.subr.mxu0 0.0
    %337 = vmatpush1.msra.mxu0 0.0
    %338 = vmatprep.subr.mxu0 0.0
    %339 = vmatpush1.msra.mxu0 0.0
    %340 = vmatprep.subr.mxu0 0.0
    %341 = vmatpush1.msra.mxu0 0.0
    %342 = vmatprep.subr.mxu0 0.0
    %343 = vmatpush1.msra.mxu0 0.0
    %344 = vmatprep.subr.mxu0 0.0
    %345 = vmatpush1.msra.mxu0 0.0
    %346 = vmatprep.subr.mxu0 0.0
    %347 = vmatpush1.msra.mxu0 0.0
    %348 = vmatprep.subr.mxu0 0.0
    %349 = vmatpush1.msra.mxu0 0.0
    %350 = vmatprep.subr.mxu0 0.0
    %351 = vmatpush1.msra.mxu0 0.0
    %352 = vmatprep.subr.mxu0 0.0
    %353 = vmatpush1.msra.mxu0 0.0
    %354 = vmatprep.subr.mxu0 0.0
    %355 = vmatpush1.msra.mxu0 0.0
    %356 = vmatprep.subr.mxu0 0.0
    %357 = vmatpush1.msra.mxu0 0.0
    %358 = vmatprep.subr.mxu0 0.0
    %359 = vmatpush1.msra.mxu0 0.0
    %360 = vmatprep.subr.mxu0 0.0
    %361 = vmatpush1.msra.mxu0 0.0
    %362 = vmatprep.subr.mxu0 0.0
    %363 = vmatpush1.msra.mxu0 0.0
    %364 = vmatprep.subr.mxu0 0.0
    %365 = vmatpush1.msra.mxu0 0.0
    %366 = vmatprep.mubr.f32.mxu0 0.0
    %367 = vmatmul.mubr.f32.gmra.mrb[0].mxu0 %v300
    %v368 = vpop.f32.mrb[0].mxu0
    %v369 = vadd.f32 %v296, %v368
    %v370 = vpop.f32.mrb[0].mxu0
    %371 = vdwg.mxu0
    %v372 = vxor.u32 %v369, 2147483648
    %v373 = vmul.f32 %v372, 1.442695
    %v374 = vpow.pop %v373
    %v375 = vadd.f32 %v374, 1.0
    %v376 = vrcp.pop %v375
    %v377 = vmul.f32 1.0, %v376
    %379 = vset.pattern.permute.xlu0 0
    %380 = vperm.xlu0 %379, %v158
    %v381 = vpop.permute.xlu0 %380
    %385 = vrot.lane.b32.xlu0 %v291, 112
    %v386 = vpop.permute.xlu0 %385
    %387 = vrot.lane.b32.xlu0 %v292, 112
    %v388 = vpop.permute.xlu0 %387
    %v392 = vsel %vm298, %v157, 0
    %394 = vmatprep.subr.mxu0 0.0
    %395 = vmatpush1.msra.mxu0 %v386
    %396 = vmatprep.subr.mxu0 0.0
    %397 = vmatpush1.msra.mxu0 %v388
    %398 = vmatprep.subr.mxu0 0.0
    %399 = vmatpush1.msra.mxu0 0.0
    %400 = vmatprep.subr.mxu0 0.0
    %401 = vmatpush1.msra.mxu0 0.0
    %402 = vmatprep.subr.mxu0 0.0
    %403 = vmatpush1.msra.mxu0 0.0
    %404 = vmatprep.subr.mxu0 0.0
    %405 = vmatpush1.msra.mxu0 0.0
    %406 = vmatprep.subr.mxu0 0.0
    %407 = vmatpush1.msra.mxu0 0.0
    %408 = vmatprep.subr.mxu0 0.0
    %409 = vmatpush1.msra.mxu0 0.0
    %410 = vmatprep.subr.mxu0 0.0
    %411 = vmatpush1.msra.mxu0 0.0
    %412 = vmatprep.subr.mxu0 0.0
    %413 = vmatpush1.msra.mxu0 0.0
    %414 = vmatprep.subr.mxu0 0.0
    %415 = vmatpush1.msra.mxu0 0.0
    %416 = vmatprep.subr.mxu0 0.0
    %417 = vmatpush1.msra.mxu0 0.0
    %418 = vmatprep.subr.mxu0 0.0
    %419 = vmatpush1.msra.mxu0 0.0
    %420 = vmatprep.subr.mxu0 0.0
    %421 = vmatpush1.msra.mxu0 0.0
    %422 = vmatprep.subr.mxu0 0.0
    %423 = vmatpush1.msra.mxu0 0.0
    %424 = vmatprep.subr.mxu0 0.0
    %425 = vmatpush1.msra.mxu0 0.0
    %426 = vmatprep.subr.mxu0 0.0
    %427 = vmatpush1.msra.mxu0 0.0
    %428 = vmatprep.subr.mxu0 0.0
    %429 = vmatpush1.msra.mxu0 0.0
    %430 = vmatprep.subr.mxu0 0.0
    %431 = vmatpush1.msra.mxu0 0.0
    %432 = vmatprep.subr.mxu0 0.0
    %433 = vmatpush1.msra.mxu0 0.0
    %434 = vmatprep.subr.mxu0 0.0
    %435 = vmatpush1.msra.mxu0 0.0
    %436 = vmatprep.subr.mxu0 0.0
    %437 = vmatpush1.msra.mxu0 0.0
    %438 = vmatprep.subr.mxu0 0.0
    %439 = vmatpush1.msra.mxu0 0.0
    %440 = vmatprep.subr.mxu0 0.0
    %441 = vmatpush1.msra.mxu0 0.0
    %442 = vmatprep.subr.mxu0 0.0
    %443 = vmatpush1.msra.mxu0 0.0
    %444 = vmatprep.subr.mxu0 0.0
    %445 = vmatpush1.msra.mxu0 0.0
    %446 = vmatprep.subr.mxu0 0.0
    %447 = vmatpush1.msra.mxu0 0.0
    %448 = vmatprep.subr.mxu0 0.0
    %449 = vmatpush1.msra.mxu0 0.0
    %450 = vmatprep.subr.mxu0 0.0
    %451 = vmatpush1.msra.mxu0 0.0
    %452 = vmatprep.subr.mxu0 0.0
    %453 = vmatpush1.msra.mxu0 0.0
    %454 = vmatprep.subr.mxu0 0.0
    %455 = vmatpush1.msra.mxu0 0.0
    %456 = vmatprep.subr.mxu0 0.0
    %457 = vmatpush1.msra.mxu0 0.0
    %458 = vmatprep.mubr.f32.mxu0 0.0
    %459 = vmatmul.mubr.f32.gmra.mrb[0].mxu0 %v392
    %v460 = vpop.f32.mrb[0].mxu0
    %v461 = vadd.f32 %v381, %v460
    %v462 = vpop.f32.mrb[0].mxu0
    %463 = vdwg.mxu0
    %v464 = vxor.u32 %v461, 2147483648
    %v465 = vmul.f32 %v464, 1.442695
    %v466 = vpow.pop %v465
    %v467 = vadd.f32 %v466, 1.0
    %v468 = vrcp.pop %v467
    %v469 = vmul.f32 1.0, %v468
    %vm470 = vcmask 125952
    %471 = vst.msk [vmem:[#allocation2] sm:$0xf] %vm470, %v377
    %472 = vst.msk [vmem:[#allocation3] sm:$0xf] %vm470, %v469
    %v473 = vrot.slane %v150, 4
    %v474 = vsel %vm176, %v473, 0
    %476 = vmatprep.subr.mxu0 0.0
    %477 = vmatpush1.msra.mxu0 %v474
    %478 = vmatprep.subr.mxu0 0.0
    %479 = vmatpush1.msra.mxu0 0.0
    %480 = vmatprep.subr.mxu0 0.0
    %481 = vmatpush1.msra.mxu0 0.0
    %482 = vmatprep.subr.mxu0 0.0
    %483 = vmatpush1.msra.mxu0 0.0
    %484 = vmatprep.subr.mxu0 0.0
    %485 = vmatpush1.msra.mxu0 0.0
    %486 = vmatprep.subr.mxu0 0.0
    %487 = vmatpush1.msra.mxu0 0.0
    %488 = vmatprep.subr.mxu0 0.0
    %489 = vmatpush1.msra.mxu0 0.0
    %490 = vmatprep.subr.mxu0 0.0
    %491 = vmatpush1.msra.mxu0 0.0
    %492 = vmatprep.subr.mxu0 0.0
    %493 = vmatpush1.msra.mxu0 0.0
    %494 = vmatprep.subr.mxu0 0.0
    %495 = vmatpush1.msra.mxu0 0.0
    %496 = vmatprep.subr.mxu0 0.0
    %497 = vmatpush1.msra.mxu0 0.0
    %498 = vmatprep.subr.mxu0 0.0
    %499 = vmatpush1.msra.mxu0 0.0
    %500 = vmatprep.subr.mxu0 0.0
    %501 = vmatpush1.msra.mxu0 0.0
    %502 = vmatprep.subr.mxu0 0.0
    %503 = vmatpush1.msra.mxu0 0.0
    %504 = vmatprep.subr.mxu0 0.0
    %505 = vmatpush1.msra.mxu0 0.0
    %506 = vmatprep.subr.mxu0 0.0
    %507 = vmatpush1.msra.mxu0 0.0
    %508 = vmatprep.subr.mxu0 0.0
    %509 = vmatpush1.msra.mxu0 0.0
    %510 = vmatprep.subr.mxu0 0.0
    %511 = vmatpush1.msra.mxu0 0.0
    %512 = vmatprep.subr.mxu0 0.0
    %513 = vmatpush1.msra.mxu0 0.0
    %514 = vmatprep.subr.mxu0 0.0
    %515 = vmatpush1.msra.mxu0 0.0
    %516 = vmatprep.subr.mxu0 0.0
    %517 = vmatpush1.msra.mxu0 0.0
    %518 = vmatprep.subr.mxu0 0.0
    %519 = vmatpush1.msra.mxu0 0.0
    %520 = vmatprep.subr.mxu0 0.0
    %521 = vmatpush1.msra.mxu0 0.0
    %522 = vmatprep.subr.mxu0 0.0
    %523 = vmatpush1.msra.mxu0 0.0
    %524 = vmatprep.subr.mxu0 0.0
    %525 = vmatpush1.msra.mxu0 0.0
    %526 = vmatprep.subr.mxu0 0.0
    %527 = vmatpush1.msra.mxu0 0.0
    %528 = vmatprep.subr.mxu0 0.0
    %529 = vmatpush1.msra.mxu0 0.0
    %530 = vmatprep.subr.mxu0 0.0
    %531 = vmatpush1.msra.mxu0 0.0
    %532 = vmatprep.subr.mxu0 0.0
    %533 = vmatpush1.msra.mxu0 0.0
    %534 = vmatprep.subr.mxu0 0.0
    %535 = vmatpush1.msra.mxu0 0.0
    %536 = vmatprep.subr.mxu0 0.0
    %537 = vmatpush1.msra.mxu0 0.0
    %538 = vmatprep.subr.mxu0 0.0
    %539 = vmatpush1.msra.mxu0 0.0
    %540 = vmatprep.mubr.f32.mxu0 0.0
    %541 = vmatmul.mubr.f32.gmra.mrb[0].mxu0 %v171
    %v542 = vpop.f32.mrb[0].mxu0
    %v543 = vadd.f32 %v162, %v542
    %v544 = vpop.f32.mrb[0].mxu0
    %545 = vmatprep.mubr.f32.mxu0 0.0
    %546 = vmatmul.mubr.f32.gmra.mrb[0].mxu0 %v174
    %v547 = vpop.f32.mrb[0].mxu0
    %v548 = vadd.f32 %v167, %v547
    %v549 = vpop.f32.mrb[0].mxu0
    %550 = vdwg.mxu0
    %v551 = vsel %vm255, %v543, 0.0
    %552 = vadd.xlane.f32.xlu0 %v551
    %v553 = vpop.xlane.xlu0 %552
    %v554 = vsel %vm255, %v548, 0.0
    %555 = vadd.xlane.f32.xlu0 %v554
    %v556 = vpop.xlane.xlu0 %555
    %v557 = vmul.f32 %v553, %v262
    %v558 = vmul.f32 %v556, %v262
    %v559 = vsub.f32 %v543, %v557
    %v560 = vsub.f32 %v548, %v558
    %v561 = vmul.f32 %v559, %v559
    %v562 = vmul.f32 %v560, %v560
    %v563 = vsel %vm255, %v561, 0.0
    %564 = vadd.xlane.f32.xlu0 %v563
    %v565 = vpop.xlane.xlu0 %564
    %v566 = vsel %vm255, %v562, 0.0
    %567 = vadd.xlane.f32.xlu0 %v566
    %v568 = vpop.xlane.xlu0 %567
    %v569 = vmul.f32 %v565, %v262
    %v570 = vmul.f32 %v568, %v262
    %v571 = vadd.f32 %v569, 1e-05
    %v572 = vadd.f32 %v570, 1e-05
    %v573 = vrsqrt.pop %v571
    %v574 = vrsqrt.pop %v572
    %v575 = vmul.f32 %v559, %v573
    %v576 = vmul.f32 %v560, %v574
    %v577 = vadd.f32 %v575, 3.0
    %v578 = vadd.f32 %v576, 3.0
    %v579 = vmax.f32 %v577, 0.0
    %v580 = vmax.f32 %v578, 0.0
    %v581 = vmin.f32 %v579, 6.0
    %v582 = vmin.f32 %v580, 6.0
    %v583 = vmul.f32 %v581, 0.16666667
    %v584 = vmul.f32 %v582, 0.16666667
    %v585 = vmul.f32 %v575, %v583
    %v586 = vmul.f32 %v576, %v584
    %587 = vmatprep.subr.mxu0 0.0
    %588 = vmatpush1.msra.mxu0 %v585
    %589 = vmatprep.subr.mxu0 0.0
    %590 = vmatpush1.msra.mxu0 %v586
    %591 = vmatprep.subr.mxu0 0.0
    %592 = vmatpush1.msra.mxu0 0.0
    %593 = vmatprep.subr.mxu0 0.0
    %594 = vmatpush1.msra.mxu0 0.0
    %595 = vmatprep.subr.mxu0 0.0
    %596 = vmatpush1.msra.mxu0 0.0
    %597 = vmatprep.subr.mxu0 0.0
    %598 = vmatpush1.msra.mxu0 0.0
    %599 = vmatprep.subr.mxu0 0.0
    %600 = vmatpush1.msra.mxu0 0.0
    %601 = vmatprep.subr.mxu0 0.0
    %602 = vmatpush1.msra.mxu0 0.0
    %603 = vmatprep.subr.mxu0 0.0
    %604 = vmatpush1.msra.mxu0 0.0
    %605 = vmatprep.subr.mxu0 0.0
    %606 = vmatpush1.msra.mxu0 0.0
    %607 = vmatprep.subr.mxu0 0.0
    %608 = vmatpush1.msra.mxu0 0.0
    %609 = vmatprep.subr.mxu0 0.0
    %610 = vmatpush1.msra.mxu0 0.0
    %611 = vmatprep.subr.mxu0 0.0
    %612 = vmatpush1.msra.mxu0 0.0
    %613 = vmatprep.subr.mxu0 0.0
    %614 = vmatpush1.msra.mxu0 0.0
    %615 = vmatprep.subr.mxu0 0.0
    %616 = vmatpush1.msra.mxu0 0.0
    %617 = vmatprep.subr.mxu0 0.0
    %618 = vmatpush1.msra.mxu0 0.0
    %619 = vmatprep.subr.mxu0 0.0
    %620 = vmatpush1.msra.mxu0 0.0
    %621 = vmatprep.subr.mxu0 0.0
    %622 = vmatpush1.msra.mxu0 0.0
    %623 = vmatprep.subr.mxu0 0.0
    %624 = vmatpush1.msra.mxu0 0.0
    %625 = vmatprep.subr.mxu0 0.0
    %626 = vmatpush1.msra.mxu0 0.0
    %627 = vmatprep.subr.mxu0 0.0
    %628 = vmatpush1.msra.mxu0 0.0
    %629 = vmatprep.subr.mxu0 0.0
    %630 = vmatpush1.msra.mxu0 0.0
    %631 = vmatprep.subr.mxu0 0.0
    %632 = vmatpush1.msra.mxu0 0.0
    %633 = vmatprep.subr.mxu0 0.0
    %634 = vmatpush1.msra.mxu0 0.0
    %635 = vmatprep.subr.mxu0 0.0
    %636 = vmatpush1.msra.mxu0 0.0
    %637 = vmatprep.subr.mxu0 0.0
    %638 = vmatpush1.msra.mxu0 0.0
    %639 = vmatprep.subr.mxu0 0.0
    %640 = vmatpush1.msra.mxu0 0.0
    %641 = vmatprep.subr.mxu0 0.0
    %642 = vmatpush1.msra.mxu0 0.0
    %643 = vmatprep.subr.mxu0 0.0
    %644 = vmatpush1.msra.mxu0 0.0
    %645 = vmatprep.subr.mxu0 0.0
    %646 = vmatpush1.msra.mxu0 0.0
    %647 = vmatprep.subr.mxu0 0.0
    %648 = vmatpush1.msra.mxu0 0.0
    %649 = vmatprep.subr.mxu0 0.0
    %650 = vmatpush1.msra.mxu0 0.0
    %651 = vmatprep.mubr.f32.mxu0 0.0
    %652 = vmatmul.mubr.f32.gmra.mrb[0].mxu0 %v300
    %v653 = vpop.f32.mrb[0].mxu0
    %v654 = vadd.f32 %v296, %v653
    %v655 = vpop.f32.mrb[0].mxu0
    %656 = vdwg.mxu0
    %v657 = vxor.u32 %v654, 2147483648
    %v658 = vmul.f32 %v657, 1.442695
    %v659 = vpow.pop %v658
    %v660 = vadd.f32 %v659, 1.0
    %v661 = vrcp.pop %v660
    %v662 = vmul.f32 1.0, %v661
    %665 = vrot.lane.b32.xlu0 %v585, 112
    %v666 = vpop.permute.xlu0 %665
    %667 = vrot.lane.b32.xlu0 %v586, 112
    %v668 = vpop.permute.xlu0 %667
    %671 = vmatprep.subr.mxu0 0.0
    %672 = vmatpush1.msra.mxu0 %v666
    %673 = vmatprep.subr.mxu0 0.0
    %674 = vmatpush1.msra.mxu0 %v668
    %675 = vmatprep.subr.mxu0 0.0
    %676 = vmatpush1.msra.mxu0 0.0
    %677 = vmatprep.subr.mxu0 0.0
    %678 = vmatpush1.msra.mxu0 0.0
    %679 = vmatprep.subr.mxu0 0.0
    %680 = vmatpush1.msra.mxu0 0.0
    %681 = vmatprep.subr.mxu0 0.0
    %682 = vmatpush1.msra.mxu0 0.0
    %683 = vmatprep.subr.mxu0 0.0
    %684 = vmatpush1.msra.mxu0 0.0
    %685 = vmatprep.subr.mxu0 0.0
    %686 = vmatpush1.msra.mxu0 0.0
    %687 = vmatprep.subr.mxu0 0.0
    %688 = vmatpush1.msra.mxu0 0.0
    %689 = vmatprep.subr.mxu0 0.0
    %690 = vmatpush1.msra.mxu0 0.0
    %691 = vmatprep.subr.mxu0 0.0
    %692 = vmatpush1.msra.mxu0 0.0
    %693 = vmatprep.subr.mxu0 0.0
    %694 = vmatpush1.msra.mxu0 0.0
    %695 = vmatprep.subr.mxu0 0.0
    %696 = vmatpush1.msra.mxu0 0.0
    %697 = vmatprep.subr.mxu0 0.0
    %698 = vmatpush1.msra.mxu0 0.0
    %699 = vmatprep.subr.mxu0 0.0
    %700 = vmatpush1.msra.mxu0 0.0
    %701 = vmatprep.subr.mxu0 0.0
    %702 = vmatpush1.msra.mxu0 0.0
    %703 = vmatprep.subr.mxu0 0.0
    %704 = vmatpush1.msra.mxu0 0.0
    %705 = vmatprep.subr.mxu0 0.0
    %706 = vmatpush1.msra.mxu0 0.0
    %707 = vmatprep.subr.mxu0 0.0
    %708 = vmatpush1.msra.mxu0 0.0
    %709 = vmatprep.subr.mxu0 0.0
    %710 = vmatpush1.msra.mxu0 0.0
    %711 = vmatprep.subr.mxu0 0.0
    %712 = vmatpush1.msra.mxu0 0.0
    %713 = vmatprep.subr.mxu0 0.0
    %714 = vmatpush1.msra.mxu0 0.0
    %715 = vmatprep.subr.mxu0 0.0
    %716 = vmatpush1.msra.mxu0 0.0
    %717 = vmatprep.subr.mxu0 0.0
    %718 = vmatpush1.msra.mxu0 0.0
    %719 = vmatprep.subr.mxu0 0.0
    %720 = vmatpush1.msra.mxu0 0.0
    %721 = vmatprep.subr.mxu0 0.0
    %722 = vmatpush1.msra.mxu0 0.0
    %723 = vmatprep.subr.mxu0 0.0
    %724 = vmatpush1.msra.mxu0 0.0
    %725 = vmatprep.subr.mxu0 0.0
    %726 = vmatpush1.msra.mxu0 0.0
    %727 = vmatprep.subr.mxu0 0.0
    %728 = vmatpush1.msra.mxu0 0.0
    %729 = vmatprep.subr.mxu0 0.0
    %730 = vmatpush1.msra.mxu0 0.0
    %731 = vmatprep.subr.mxu0 0.0
    %732 = vmatpush1.msra.mxu0 0.0
    %733 = vmatprep.subr.mxu0 0.0
    %734 = vmatpush1.msra.mxu0 0.0
    %735 = vmatprep.mubr.f32.mxu0 0.0
    %736 = vmatmul.mubr.f32.gmra.mrb[0].mxu0 %v392
    %v737 = vpop.f32.mrb[0].mxu0
    %v738 = vadd.f32 %v381, %v737
    %v739 = vpop.f32.mrb[0].mxu0
    %740 = vdwg.mxu0
    %v741 = vxor.u32 %v738, 2147483648
    %v742 = vmul.f32 %v741, 1.442695
    %v743 = vpow.pop %v742
    %v744 = vadd.f32 %v743, 1.0
    %v745 = vrcp.pop %v744
    %v746 = vmul.f32 1.0, %v745
    %747 = vst.msk [vmem:[#allocation2 + $0x4] sm:$0xf] %vm470, %v662
    %748 = vst.msk [vmem:[#allocation3 + $0x4] sm:$0xf] %vm470, %v746
    %v749 = vld [vmem:[#allocation2] sm:$0xff]
    %v750 = vld [vmem:[%s9] sm:$0xff]
    %v751 = vld [vmem:[%s9 + $0x8] sm:$0xff]
    %v752 = vld [vmem:[%s9 + $0x10] sm:$0xff]
    %v753 = vld [vmem:[%s9 + $0x18] sm:$0xff]
    %v755 = vsel %vm298, %v749, 0
    %757 = vmatprep.subr.mxu0 %v751
    %758 = vmatpush1.msra.mxu0 %v750
    %759 = vmatprep.subr.mxu0 %v753
    %760 = vmatpush1.msra.mxu0 %v752
    %761 = vmatprep.subr.mxu0 0.0
    %762 = vmatpush1.msra.mxu0 0.0
    %763 = vmatprep.subr.mxu0 0.0
    %764 = vmatpush1.msra.mxu0 0.0
    %765 = vmatprep.subr.mxu0 0.0
    %766 = vmatpush1.msra.mxu0 0.0
    %767 = vmatprep.subr.mxu0 0.0
    %768 = vmatpush1.msra.mxu0 0.0
    %769 = vmatprep.subr.mxu0 0.0
    %770 = vmatpush1.msra.mxu0 0.0
    %771 = vmatprep.subr.mxu0 0.0
    %772 = vmatpush1.msra.mxu0 0.0
    %773 = vmatprep.subr.mxu0 0.0
    %774 = vmatpush1.msra.mxu0 0.0
    %775 = vmatprep.subr.mxu0 0.0
    %776 = vmatpush1.msra.mxu0 0.0
    %777 = vmatprep.subr.mxu0 0.0
    %778 = vmatpush1.msra.mxu0 0.0
    %779 = vmatprep.subr.mxu0 0.0
    %780 = vmatpush1.msra.mxu0 0.0
    %781 = vmatprep.subr.mxu0 0.0
    %782 = vmatpush1.msra.mxu0 0.0
    %783 = vmatprep.subr.mxu0 0.0
    %784 = vmatpush1.msra.mxu0 0.0
    %785 = vmatprep.subr.mxu0 0.0
    %786 = vmatpush1.msra.mxu0 0.0
    %787 = vmatprep.subr.mxu0 0.0
    %788 = vmatpush1.msra.mxu0 0.0
    %789 = vmatprep.subr.mxu0 0.0
    %790 = vmatpush1.msra.mxu0 0.0
    %791 = vmatprep.subr.mxu0 0.0
    %792 = vmatpush1.msra.mxu0 0.0
    %793 = vmatprep.subr.mxu0 0.0
    %794 = vmatpush1.msra.mxu0 0.0
    %795 = vmatprep.subr.mxu0 0.0
    %796 = vmatpush1.msra.mxu0 0.0
    %797 = vmatprep.subr.mxu0 0.0
    %798 = vmatpush1.msra.mxu0 0.0
    %799 = vmatprep.subr.mxu0 0.0
    %800 = vmatpush1.msra.mxu0 0.0
    %801 = vmatprep.subr.mxu0 0.0
    %802 = vmatpush1.msra.mxu0 0.0
    %803 = vmatprep.subr.mxu0 0.0
    %804 = vmatpush1.msra.mxu0 0.0
    %805 = vmatprep.subr.mxu0 0.0
    %806 = vmatpush1.msra.mxu0 0.0
    %807 = vmatprep.subr.mxu0 0.0
    %808 = vmatpush1.msra.mxu0 0.0
    %809 = vmatprep.subr.mxu0 0.0
    %810 = vmatpush1.msra.mxu0 0.0
    %811 = vmatprep.subr.mxu0 0.0
    %812 = vmatpush1.msra.mxu0 0.0
    %813 = vmatprep.subr.mxu0 0.0
    %814 = vmatpush1.msra.mxu0 0.0
    %815 = vmatprep.subr.mxu0 0.0
    %816 = vmatpush1.msra.mxu0 0.0
    %817 = vmatprep.subr.mxu0 0.0
    %818 = vmatpush1.msra.mxu0 0.0
    %819 = vmatprep.subr.mxu0 0.0
    %820 = vmatpush1.msra.mxu0 0.0
    %821 = vmatprep.mubr.f32.mxu0 0.0
    %822 = vmatmul.mubr.f32.gmra.mrb[0].mxu0 %v755
    %v823 = vpop.f32.mrb[0].mxu0
    %v824 = vadd.f32 0.0, %v823
    %v825 = vpop.f32.mrb[0].mxu0
    %v826 = vadd.f32 0.0, %v825
    %827 = vdwg.mxu0
    %v828 = vld [vmem:[#allocation3] sm:$0xff]
    %v829 = vld [vmem:[%s10] sm:$0xff]
    %v830 = vld [vmem:[%s10 + $0x8] sm:$0xff]
    %v831 = vld [vmem:[%s10 + $0x10] sm:$0xff]
    %v832 = vld [vmem:[%s10 + $0x18] sm:$0xff]
    %v834 = vsel %vm298, %v828, 0
    %836 = vmatprep.subr.mxu0 %v830
    %837 = vmatpush1.msra.mxu0 %v829
    %838 = vmatprep.subr.mxu0 %v832
    %839 = vmatpush1.msra.mxu0 %v831
    %840 = vmatprep.subr.mxu0 0.0
    %841 = vmatpush1.msra.mxu0 0.0
    %842 = vmatprep.subr.mxu0 0.0
    %843 = vmatpush1.msra.mxu0 0.0
    %844 = vmatprep.subr.mxu0 0.0
    %845 = vmatpush1.msra.mxu0 0.0
    %846 = vmatprep.subr.mxu0 0.0
    %847 = vmatpush1.msra.mxu0 0.0
    %848 = vmatprep.subr.mxu0 0.0
    %849 = vmatpush1.msra.mxu0 0.0
    %850 = vmatprep.subr.mxu0 0.0
    %851 = vmatpush1.msra.mxu0 0.0
    %852 = vmatprep.subr.mxu0 0.0
    %853 = vmatpush1.msra.mxu0 0.0
    %854 = vmatprep.subr.mxu0 0.0
    %855 = vmatpush1.msra.mxu0 0.0
    %856 = vmatprep.subr.mxu0 0.0
    %857 = vmatpush1.msra.mxu0 0.0
    %858 = vmatprep.subr.mxu0 0.0
    %859 = vmatpush1.msra.mxu0 0.0
    %860 = vmatprep.subr.mxu0 0.0
    %861 = vmatpush1.msra.mxu0 0.0
    %862 = vmatprep.subr.mxu0 0.0
    %863 = vmatpush1.msra.mxu0 0.0
    %864 = vmatprep.subr.mxu0 0.0
    %865 = vmatpush1.msra.mxu0 0.0
    %866 = vmatprep.subr.mxu0 0.0
    %867 = vmatpush1.msra.mxu0 0.0
    %868 = vmatprep.subr.mxu0 0.0
    %869 = vmatpush1.msra.mxu0 0.0
    %870 = vmatprep.subr.mxu0 0.0
    %871 = vmatpush1.msra.mxu0 0.0
    %872 = vmatprep.subr.mxu0 0.0
    %873 = vmatpush1.msra.mxu0 0.0
    %874 = vmatprep.subr.mxu0 0.0
    %875 = vmatpush1.msra.mxu0 0.0
    %876 = vmatprep.subr.mxu0 0.0
    %877 = vmatpush1.msra.mxu0 0.0
    %878 = vmatprep.subr.mxu0 0.0
    %879 = vmatpush1.msra.mxu0 0.0
    %880 = vmatprep.subr.mxu0 0.0
    %881 = vmatpush1.msra.mxu0 0.0
    %882 = vmatprep.subr.mxu0 0.0
    %883 = vmatpush1.msra.mxu0 0.0
    %884 = vmatprep.subr.mxu0 0.0
    %885 = vmatpush1.msra.mxu0 0.0
    %886 = vmatprep.subr.mxu0 0.0
    %887 = vmatpush1.msra.mxu0 0.0
    %888 = vmatprep.subr.mxu0 0.0
    %889 = vmatpush1.msra.mxu0 0.0
    %890 = vmatprep.subr.mxu0 0.0
    %891 = vmatpush1.msra.mxu0 0.0
    %892 = vmatprep.subr.mxu0 0.0
    %893 = vmatpush1.msra.mxu0 0.0
    %894 = vmatprep.subr.mxu0 0.0
    %895 = vmatpush1.msra.mxu0 0.0
    %896 = vmatprep.subr.mxu0 0.0
    %897 = vmatpush1.msra.mxu0 0.0
    %898 = vmatprep.subr.mxu0 0.0
    %899 = vmatpush1.msra.mxu0 0.0
    %900 = vmatprep.mubr.f32.mxu0 0.0
    %901 = vmatmul.mubr.f32.gmra.mrb[0].mxu0 %v834
    %v902 = vpop.f32.mrb[0].mxu0
    %v903 = vadd.f32 0.0, %v902
    %v904 = vpop.f32.mrb[0].mxu0
    %v905 = vadd.f32 0.0, %v904
    %906 = vdwg.mxu0
    %v907 = vmul.f32 %v824, %v903
    %v908 = vmul.f32 %v826, %v905
    %v909 = vadd.f32 %v907, 1.0
    %v910 = vadd.f32 %v908, 1.0
    %v911 = vld [vmem:[%s0] sm:$0xff]
    %v912 = vld [vmem:[%s0 + $0x8] sm:$0xff]
    %v913 = vmul.f32 %v911, %v909
    %v914 = vmul.f32 %v912, %v910
    %915 = vst [vmem:[#allocation4] sm:$0xff] %v913
    %916 = vst [vmem:[#allocation4 + $0x8] sm:$0xff] %v914
    // Predicated region
    $region46: #{tpu_custom_call.1} parent=1 // pred_check
      _
    $region47: #{tpu_custom_call.1} parent=1 // pred_check_branch
      %918 = sbr.rel (0) target = $region49
    $region48: #{tpu_custom_call.1} parent=1 // pred_region
      %s920 = ssub.s32 256, 256
      %921 = vsyncadd [#allocation5], %s920
      %s923 = sshll.u32 [#allocation4], 4
      %s924 = int_to_ptr.vmem [resolvable:$true] %s923
      %926 = dma.vmem_to_hbm [thread:$0]  %s924, 256, %s11, [#allocation5]
    $region49: #{tpu_custom_call.1} parent=1 // pred_fallthru
      _
    // Predicated region
    $region50: #{tpu_custom_call.1} parent=1 // pred_check
      _
    $region51: #{tpu_custom_call.1} parent=1 // pred_check_branch
      %928 = sbr.rel (0) target = $region53
    $region52: #{tpu_custom_call.1} parent=1 // pred_region
      %929 = dma.done [#allocation5], 256
    $region53: #{tpu_custom_call.1} parent=1 // pred_fallthru
      _
    %930 = vsyncpa [#allocation5], 1

</llo_original>
